<compile_context>
chip_gen: v7x
topology: tpu7x:2x2x1
jax: 0.10.0
libtpu: 0.0.40
codegen_flags: <defaults>
</compile_context>

<pallas_src>
import functools

import jax
import jax.numpy as jnp
from jax.experimental import pallas as pl
from jax.experimental.pallas import tpu as pltpu

PAD = 128                 # lane width every feature dim is padded to
ENCODED_COND_DIM = 4      # matches CVAE.__init__
COND_HIDDEN = 8
LOGVAR_OFF = 64           # fc22 output columns inside the fused fc21|fc22 tile


def _round_up(n, m):
    return (n + m - 1) // m * m


# ---------------------------------------------------------------------------
# Kernel
# ---------------------------------------------------------------------------
def cvae_kernel(num_enc, num_dec, input_size, latent_size,
                x_ref, c_ref, eps_ref, w_ref, b_ref, out_ref):
    """One batch tile of the full CVAE forward.

    w_ref: (NW, 128, 128) bf16 packed padded weights (y = h @ W + b layout).
    b_ref: (NW,   1, 128) f32  packed padded biases.
    Slab order: cond1, cond2 (output cols packed at BOTH concat offsets),
                enc[0..num_enc-1], fused fc21|fc22, dec[0..num_dec-1].
    """
    # Lane masks that split the single cond-encoder matmul into the two
    # "concat" summands.  Computed once; shared by both batch halves.
    lane = jax.lax.broadcasted_iota(jnp.int32, (1, PAD), 1)
    enc_mask = (lane >= input_size) & (lane < input_size + ENCODED_COND_DIM)
    dec_mask = (lane >= latent_size) & (lane < latent_size + ENCODED_COND_DIM)

    def lin(h, i):
        # bf16 MXU operands, f32 accumulation; bias add stays f32 on the VPU.
        return jnp.dot(h.astype(jnp.bfloat16), w_ref[i],
                       preferred_element_type=jnp.float32) + b_ref[i]

    def chain(x, c, eps):
        # Condition encoder: Linear -> tanh -> Linear.  One matmul feeds both
        # torch.cat fusions; the lane masks pick each pre-positioned copy.
        ch = jnp.tanh(lin(c, 0))
        ce = lin(ch, 1)
        ce_enc = jnp.where(enc_mask, ce, 0.0)   # nonzero only on [in, in+4)
        ce_dec = jnp.where(dec_mask, ce, 0.0)   # nonzero only on [lat, lat+4)

        # ---- encode ----
        h = jnp.tanh(lin(x + ce_enc, 2))        # fused concat + first layer
        for l in range(1, num_enc):
            h = jnp.tanh(lin(h, 2 + l))
        # Fused fc21|fc22: mu in lanes [0, L), logvar in lanes [64, 64+L).
        mulv = lin(h, 2 + num_enc)
        # 64-lane rotate brings logvar to [0, L); shift == PAD/2, so the result
        # is identical for either rotate direction.  XLU slot -> ~free.
        lv_al = pltpu.roll(mulv, LOGVAR_OFF, axis=1)

        # ---- reparameterize ----
        # Invariant: eps is zero-padded beyond latent_size and mulv is zero on
        # [latent_size, LOGVAR_OFF), so z is exactly zero on the lanes the fused
        # z + ce_dec concat cares about; garbage beyond LOGVAR_OFF only hits
        # zero-padded rows of the first decode weight.
        z = mulv + eps * jnp.exp(0.5 * lv_al)

        # ---- decode ----
        d0 = 3 + num_enc
        h = jnp.tanh(lin(z + ce_dec, d0))       # fused concat + first layer
        for l in range(1, num_dec - 1):
            h = jnp.tanh(lin(h, d0 + l))
        recon = lin(h, d0 + num_dec - 1)        # last layer: no activation
        return recon, mulv, lv_al

    # Two independent batch halves in one straight-line trace: lets the LLO
    # scheduler overlap one half's MXU passes with the other half's EUP work.
    H = x_ref.shape[0] // 2
    ra, ma, la = chain(x_ref[0:H], c_ref[0:H], eps_ref[0:H])
    rb, mb, lb = chain(x_ref[H:2 * H], c_ref[H:2 * H], eps_ref[H:2 * H])

    # Lane-dense output slab: [recon | mu | logvar], 128 lanes each.
    out_ref[0:H, 0:PAD] = ra
    out_ref[0:H, PAD:2 * PAD] = ma
    out_ref[0:H, 2 * PAD:3 * PAD] = la
    out_ref[H:2 * H, 0:PAD] = rb
    out_ref[H:2 * H, PAD:2 * PAD] = mb
    out_ref[H:2 * H, 2 * PAD:3 * PAD] = lb


# ---------------------------------------------------------------------------
# Parameter construction (deterministic, synthetic — mirrors CVAE.__init__)
# ---------------------------------------------------------------------------
def _init_linear(key, in_dim, out_dim):
    kw, kb = jax.random.split(key)
    bound = 1.0 / (in_dim ** 0.5)
    w = jax.random.uniform(kw, (in_dim, out_dim), jnp.float32, -bound, bound)
    b = jax.random.uniform(kb, (1, out_dim), jnp.float32, -bound, bound)
    return w, b


def init_params(key, input_size, latent_size, condition_size, num_layers):
    keys = iter(jax.random.split(key, 4 * num_layers + 8))
    cond = [_init_linear(next(keys), condition_size, COND_HIDDEN),
            _init_linear(next(keys), COND_HIDDEN, ENCODED_COND_DIM)]
    enc = []
    l = input_size + ENCODED_COND_DIM
    for i in range(num_layers, 1, -1):
        out = latent_size * 2 ** (i - 1)
        enc.append(_init_linear(next(keys), l, out))
        l = out
    fc21 = _init_linear(next(keys), l, latent_size)
    fc22 = _init_linear(next(keys), l, latent_size)
    dec = []
    l = latent_size + ENCODED_COND_DIM
    for i in range(1, num_layers):
        out = latent_size * 2 ** i
        dec.append(_init_linear(next(keys), l, out))
        l = out
    dec.append(_init_linear(next(keys), l, input_size))
    return dict(cond=cond, enc=enc, fc21=fc21, fc22=fc22, dec=dec)


# ---------------------------------------------------------------------------
# Packing into lane-aligned slabs
# ---------------------------------------------------------------------------
def _pad_w(w, col_offset=0):
    assert w.shape[0] <= PAD and col_offset + w.shape[1] <= PAD, (
        "feature dims must fit in one 128-lane tile")
    # TODO(synk): for hidden widths > 128, tile the feature dims and/or stream
    # per-layer weights with pltpu.make_async_copy instead of a resident slab.
    out = jnp.zeros((PAD, PAD), jnp.float32)
    return out.at[:w.shape[0], col_offset:col_offset + w.shape[1]].set(w)


def _pad_b(b, col_offset=0):
    b = b.reshape(1, -1)
    assert col_offset + b.shape[1] <= PAD
    out = jnp.zeros((1, PAD), jnp.float32)
    return out.at[:, col_offset:col_offset + b.shape[1]].set(b)


def pack_params(p, input_size, latent_size):
    # Packing invariants required by the fused matmuls in the kernel.
    assert input_size + ENCODED_COND_DIM <= PAD
    assert latent_size + ENCODED_COND_DIM <= LOGVAR_OFF
    assert LOGVAR_OFF + latent_size <= PAD
    # The two concat offsets must be disjoint so one cond-encoder matmul can
    # serve both.  TODO(synk): fall back to packing cond2 twice (two matmuls)
    # when |input_size - latent_size| < ENCODED_COND_DIM.
    assert abs(input_size - latent_size) >= ENCODED_COND_DIM

    ws, bs = [], []
    (cw1, cb1), (cw2, cb2) = p["cond"]
    ws.append(_pad_w(cw1))
    bs.append(_pad_b(cb1))
    # cond2 packed at BOTH concat offsets -> one matmul feeds both concats.
    ws.append(_pad_w(cw2, input_size) + _pad_w(cw2, latent_size))
    bs.append(_pad_b(cb2, input_size) + _pad_b(cb2, latent_size))
    for w, b in p["enc"]:
        ws.append(_pad_w(w)); bs.append(_pad_b(b))
    # fc21 | fc22 fused into one tile (mu at cols [0,L), logvar at [64,64+L)).
    (w21, b21), (w22, b22) = p["fc21"], p["fc22"]
    ws.append(_pad_w(w21) + _pad_w(w22, LOGVAR_OFF))
    bs.append(_pad_b(b21) + _pad_b(b22, LOGVAR_OFF))
    for w, b in p["dec"]:
        ws.append(_pad_w(w)); bs.append(_pad_b(b))

    w_slab = jnp.stack(ws).astype(jnp.bfloat16)   # bf16 MXU operands
    b_slab = jnp.stack(bs)                        # biases stay f32
    return w_slab, b_slab                          # (NW,128,128), (NW,1,128)


# ---------------------------------------------------------------------------
# Pallas wrapper
# ---------------------------------------------------------------------------
def cvae_forward(x, c, eps, w_slab, b_slab, *, input_size, latent_size,
                 num_layers, batch_tile=512):
    assert num_layers >= 2
    B = x.shape[0]
    num_enc = num_layers - 1     # tanh encode layers (first one is the concat layer)
    num_dec = num_layers         # decode layers (last one has no activation)
    NW = w_slab.shape[0]
    assert NW == 2 * num_layers + 2

    # TB is always a multiple of 16 (the kernel splits each tile into two
    # sublane-aligned halves).  For small B aim for a 2-step grid so
    # dimension_semantics=("parallel",) can shard across both TensorCores on
    # v7x; for large B use the (big) batch_tile to amortize per-step overhead.
    if B <= batch_tile:
        TB = _round_up(max((B + 1) // 2, 8), 16)
    else:
        TB = _round_up(batch_tile, 16)
    B_pad = _round_up(B, TB)

    def pad_in(a):
        out = jnp.zeros((B_pad, PAD), jnp.float32)
        return out.at[:B, :a.shape[1]].set(a.astype(jnp.float32))

    x_p, c_p, eps_p = pad_in(x), pad_in(c), pad_in(eps)

    kernel = functools.partial(cvae_kernel, num_enc, num_dec,
                               input_size, latent_size)
    batch_spec = pl.BlockSpec((TB, PAD), lambda i: (i, 0))
    out = pl.pallas_call(
        kernel,
        out_shape=jax.ShapeDtypeStruct((B_pad, 3 * PAD), jnp.float32),
        grid=(B_pad // TB,),
        in_specs=[
            batch_spec,                                         # x
            batch_spec,                                         # c
            batch_spec,                                         # eps
            pl.BlockSpec((NW, PAD, PAD), lambda i: (0, 0, 0)),  # weight slab (resident)
            pl.BlockSpec((NW, 1, PAD), lambda i: (0, 0, 0)),    # bias slab (resident)
        ],
        out_specs=pl.BlockSpec((TB, 3 * PAD), lambda i: (i, 0)),
        compiler_params=pltpu.CompilerParams(
            dimension_semantics=("parallel",),   # both TensorCores on v7x
        ),
    )(x_p, c_p, eps_p, w_slab, b_slab)

    recon = out[:B, 0:input_size]
    mu = out[:B, PAD:PAD + latent_size]
    logvar = out[:B, 2 * PAD:2 * PAD + latent_size]
    return recon, mu, logvar


# ---------------------------------------------------------------------------
# Pure-JAX reference (for correctness check)
# ---------------------------------------------------------------------------
def cvae_ref(x, c, eps, p):
    (cw1, cb1), (cw2, cb2) = p["cond"]
    ce = jnp.tanh(c @ cw1 + cb1) @ cw2 + cb2
    h = jnp.concatenate([x, ce], axis=1)
    for w, b in p["enc"]:
        h = jnp.tanh(h @ w + b)
    mu = h @ p["fc21"][0] + p["fc21"][1]
    logvar = h @ p["fc22"][0] + p["fc22"][1]
    z = mu + eps * jnp.exp(0.5 * logvar)
    h = jnp.concatenate([z, ce], axis=1)
    for w, b in p["dec"][:-1]:
        h = jnp.tanh(h @ w + b)
    recon = h @ p["dec"][-1][0] + p["dec"][-1][1]
    return recon, mu, logvar


if __name__ == "__main__":
    B = 64
    input_size = 16
    latent_size = 8
    condition_size = 6
    num_layers = 3

    key = jax.random.PRNGKey(0)
    kx, kc, ke, kp = jax.random.split(key, 4)
    x = jax.random.normal(kx, (B, input_size), jnp.float32)
    c = jax.random.normal(kc, (B, condition_size), jnp.float32)
    # eps is the randn_like from reparameterize(), made explicit for determinism.
    eps = jax.random.normal(ke, (B, latent_size), jnp.float32)

    params = init_params(kp, input_size, latent_size, condition_size, num_layers)
    w_slab, b_slab = pack_params(params, input_size, latent_size)

    recon, mu, logvar = cvae_forward(
        x, c, eps, w_slab, b_slab,
        input_size=input_size, latent_size=latent_size, num_layers=num_layers,
    )
    jax.block_until_ready((recon, mu, logvar))

    r_ref, mu_ref, lv_ref = cvae_ref(x, c, eps, params)
    assert recon.shape == (B, input_size)
    assert mu.shape == (B, latent_size) and logvar.shape == (B, latent_size)
    # bf16 MXU operands vs the f32 reference -> loosened tolerance.
    assert jnp.allclose(recon, r_ref, atol=5e-2, rtol=5e-2), "recon mismatch"
    assert jnp.allclose(mu, mu_ref, atol=5e-2, rtol=5e-2), "mu mismatch"
    assert jnp.allclose(logvar, lv_ref, atol=5e-2, rtol=5e-2), "logvar mismatch"

    print("KERNEL_OK")
</pallas_src>

<mosaic_0001>
module attributes {stable_mosaic.version = 11 : i64} {
  func.func @cvae_kernel(%arg0: i32, %arg1: memref<32x128xf32, #tpu.memory_space<vmem>>, %arg2: memref<32x128xf32, #tpu.memory_space<vmem>>, %arg3: memref<32x128xf32, #tpu.memory_space<vmem>>, %arg4: memref<8x128x128xbf16, #tpu.memory_space<vmem>>, %arg5: memref<8x1x128xf32, #tpu.memory_space<vmem>>, %arg6: memref<32x384xf32, #tpu.memory_space<vmem>>) attributes {dimension_semantics = [#tpu.dimension_semantics<parallel>], iteration_bounds = array<i64: 2>, scalar_prefetch = 0 : i64, scratch_operands = 0 : i64, tpu.core_type = #tpu.core_type<tc>, window_params = [{transform_indices = @transform_0, window_bounds = array<i64: 32, 128>}, {transform_indices = @transform_1, window_bounds = array<i64: 32, 128>}, {transform_indices = @transform_2, window_bounds = array<i64: 32, 128>}, {pipeline_mode = #tpu.pipeline_mode<synchronous>, transform_indices = @transform_3, window_bounds = array<i64: 8, 128, 128>}, {pipeline_mode = #tpu.pipeline_mode<synchronous>, transform_indices = @transform_4, window_bounds = array<i64: 8, 1, 128>}, {transform_indices = @transform_5, window_bounds = array<i64: 32, 384>}]} {
    %0 = tpu.iota {dimensions = array<i32: 1>} : vector<1x128xi32>
    %c16_i32 = arith.constant 16 : i32
    %1 = vector.broadcast %c16_i32 : i32 to vector<1x128xi32>
    %2 = arith.cmpi sge, %0, %1 : vector<1x128xi32>
    %c20_i32 = arith.constant 20 : i32
    %3 = vector.broadcast %c20_i32 : i32 to vector<1x128xi32>
    %4 = arith.cmpi slt, %0, %3 : vector<1x128xi32>
    %5 = arith.andi %2, %4 : vector<1x128xi1>
    %c8_i32 = arith.constant 8 : i32
    %6 = vector.broadcast %c8_i32 : i32 to vector<1x128xi32>
    %7 = arith.cmpi sge, %0, %6 : vector<1x128xi32>
    %c12_i32 = arith.constant 12 : i32
    %8 = vector.broadcast %c12_i32 : i32 to vector<1x128xi32>
    %9 = arith.cmpi slt, %0, %8 : vector<1x128xi32>
    %10 = arith.andi %7, %9 : vector<1x128xi1>
    %c0 = arith.constant 0 : index
    %c0_0 = arith.constant 0 : index
    %11 = vector.load %arg1[%c0, %c0_0] : memref<32x128xf32, #tpu.memory_space<vmem>>, vector<16x128xf32>
    %c0_1 = arith.constant 0 : index
    %c0_2 = arith.constant 0 : index
    %12 = vector.load %arg2[%c0_1, %c0_2] : memref<32x128xf32, #tpu.memory_space<vmem>>, vector<16x128xf32>
    %c0_3 = arith.constant 0 : index
    %c0_4 = arith.constant 0 : index
    %13 = vector.load %arg3[%c0_3, %c0_4] : memref<32x128xf32, #tpu.memory_space<vmem>>, vector<16x128xf32>
    %14 = arith.truncf %12 : vector<16x128xf32> to vector<16x128xbf16>
    %c0_5 = arith.constant 0 : index
    %c0_6 = arith.constant 0 : index
    %c0_7 = arith.constant 0 : index
    %15 = vector.load %arg4[%c0_5, %c0_6, %c0_7] : memref<8x128x128xbf16, #tpu.memory_space<vmem>>, vector<1x128x128xbf16>
    %16 = vector.shape_cast %15 : vector<1x128x128xbf16> to vector<128x128xbf16>
    %cst = arith.constant dense<0.000000e+00> : vector<16x128xf32>
    %17 = tpu.matmul %14, %16, %cst {dimension_numbers = #tpu.dot_dimension_numbers<[1], [0], [0], [1], [0, 0, 1, 1], [], []>} : vector<16x128xbf16>, vector<128x128xbf16>, vector<16x128xf32> -> vector<16x128xf32>
    %c0_8 = arith.constant 0 : index
    %c0_9 = arith.constant 0 : index
    %c0_10 = arith.constant 0 : index
    %18 = vector.load %arg5[%c0_8, %c0_9, %c0_10] : memref<8x1x128xf32, #tpu.memory_space<vmem>>, vector<1x1x128xf32>
    %19 = vector.shape_cast %18 : vector<1x1x128xf32> to vector<1x128xf32>
    %20 = vector.broadcast %19 : vector<1x128xf32> to vector<16x128xf32>
    %21 = arith.addf %17, %20 : vector<16x128xf32>
    %22 = math.tanh %21 : vector<16x128xf32>
    %23 = arith.truncf %22 : vector<16x128xf32> to vector<16x128xbf16>
    %c1 = arith.constant 1 : index
    %c0_11 = arith.constant 0 : index
    %c0_12 = arith.constant 0 : index
    %24 = vector.load %arg4[%c1, %c0_11, %c0_12] : memref<8x128x128xbf16, #tpu.memory_space<vmem>>, vector<1x128x128xbf16>
    %25 = vector.shape_cast %24 : vector<1x128x128xbf16> to vector<128x128xbf16>
    %cst_13 = arith.constant dense<0.000000e+00> : vector<16x128xf32>
    %26 = tpu.matmul %23, %25, %cst_13 {dimension_numbers = #tpu.dot_dimension_numbers<[1], [0], [0], [1], [0, 0, 1, 1], [], []>} : vector<16x128xbf16>, vector<128x128xbf16>, vector<16x128xf32> -> vector<16x128xf32>
    %c1_14 = arith.constant 1 : index
    %c0_15 = arith.constant 0 : index
    %c0_16 = arith.constant 0 : index
    %27 = vector.load %arg5[%c1_14, %c0_15, %c0_16] : memref<8x1x128xf32, #tpu.memory_space<vmem>>, vector<1x1x128xf32>
    %28 = vector.shape_cast %27 : vector<1x1x128xf32> to vector<1x128xf32>
    %29 = vector.broadcast %28 : vector<1x128xf32> to vector<16x128xf32>
    %30 = arith.addf %26, %29 : vector<16x128xf32>
    %cst_17 = arith.constant 0.000000e+00 : f32
    %31 = vector.shape_cast %5 : vector<1x128xi1> to vector<1x128xi1>
    %32 = vector.broadcast %31 : vector<1x128xi1> to vector<16x128xi1>
    %33 = vector.broadcast %cst_17 : f32 to vector<16x128xf32>
    %34 = arith.select %32, %30, %33 : vector<16x128xi1>, vector<16x128xf32>
    %cst_18 = arith.constant 0.000000e+00 : f32
    %35 = vector.shape_cast %10 : vector<1x128xi1> to vector<1x128xi1>
    %36 = vector.broadcast %35 : vector<1x128xi1> to vector<16x128xi1>
    %37 = vector.broadcast %cst_18 : f32 to vector<16x128xf32>
    %38 = arith.select %36, %30, %37 : vector<16x128xi1>, vector<16x128xf32>
    %39 = arith.addf %11, %34 : vector<16x128xf32>
    %40 = arith.truncf %39 : vector<16x128xf32> to vector<16x128xbf16>
    %c2 = arith.constant 2 : index
    %c0_19 = arith.constant 0 : index
    %c0_20 = arith.constant 0 : index
    %41 = vector.load %arg4[%c2, %c0_19, %c0_20] : memref<8x128x128xbf16, #tpu.memory_space<vmem>>, vector<1x128x128xbf16>
    %42 = vector.shape_cast %41 : vector<1x128x128xbf16> to vector<128x128xbf16>
    %cst_21 = arith.constant dense<0.000000e+00> : vector<16x128xf32>
    %43 = tpu.matmul %40, %42, %cst_21 {dimension_numbers = #tpu.dot_dimension_numbers<[1], [0], [0], [1], [0, 0, 1, 1], [], []>} : vector<16x128xbf16>, vector<128x128xbf16>, vector<16x128xf32> -> vector<16x128xf32>
    %c2_22 = arith.constant 2 : index
    %c0_23 = arith.constant 0 : index
    %c0_24 = arith.constant 0 : index
    %44 = vector.load %arg5[%c2_22, %c0_23, %c0_24] : memref<8x1x128xf32, #tpu.memory_space<vmem>>, vector<1x1x128xf32>
    %45 = vector.shape_cast %44 : vector<1x1x128xf32> to vector<1x128xf32>
    %46 = vector.broadcast %45 : vector<1x128xf32> to vector<16x128xf32>
    %47 = arith.addf %43, %46 : vector<16x128xf32>
    %48 = math.tanh %47 : vector<16x128xf32>
    %49 = arith.truncf %48 : vector<16x128xf32> to vector<16x128xbf16>
    %c3 = arith.constant 3 : index
    %c0_25 = arith.constant 0 : index
    %c0_26 = arith.constant 0 : index
    %50 = vector.load %arg4[%c3, %c0_25, %c0_26] : memref<8x128x128xbf16, #tpu.memory_space<vmem>>, vector<1x128x128xbf16>
    %51 = vector.shape_cast %50 : vector<1x128x128xbf16> to vector<128x128xbf16>
    %cst_27 = arith.constant dense<0.000000e+00> : vector<16x128xf32>
    %52 = tpu.matmul %49, %51, %cst_27 {dimension_numbers = #tpu.dot_dimension_numbers<[1], [0], [0], [1], [0, 0, 1, 1], [], []>} : vector<16x128xbf16>, vector<128x128xbf16>, vector<16x128xf32> -> vector<16x128xf32>
    %c3_28 = arith.constant 3 : index
    %c0_29 = arith.constant 0 : index
    %c0_30 = arith.constant 0 : index
    %53 = vector.load %arg5[%c3_28, %c0_29, %c0_30] : memref<8x1x128xf32, #tpu.memory_space<vmem>>, vector<1x1x128xf32>
    %54 = vector.shape_cast %53 : vector<1x1x128xf32> to vector<1x128xf32>
    %55 = vector.broadcast %54 : vector<1x128xf32> to vector<16x128xf32>
    %56 = arith.addf %52, %55 : vector<16x128xf32>
    %57 = math.tanh %56 : vector<16x128xf32>
    %58 = arith.truncf %57 : vector<16x128xf32> to vector<16x128xbf16>
    %c4 = arith.constant 4 : index
    %c0_31 = arith.constant 0 : index
    %c0_32 = arith.constant 0 : index
    %59 = vector.load %arg4[%c4, %c0_31, %c0_32] : memref<8x128x128xbf16, #tpu.memory_space<vmem>>, vector<1x128x128xbf16>
    %60 = vector.shape_cast %59 : vector<1x128x128xbf16> to vector<128x128xbf16>
    %cst_33 = arith.constant dense<0.000000e+00> : vector<16x128xf32>
    %61 = tpu.matmul %58, %60, %cst_33 {dimension_numbers = #tpu.dot_dimension_numbers<[1], [0], [0], [1], [0, 0, 1, 1], [], []>} : vector<16x128xbf16>, vector<128x128xbf16>, vector<16x128xf32> -> vector<16x128xf32>
    %c4_34 = arith.constant 4 : index
    %c0_35 = arith.constant 0 : index
    %c0_36 = arith.constant 0 : index
    %62 = vector.load %arg5[%c4_34, %c0_35, %c0_36] : memref<8x1x128xf32, #tpu.memory_space<vmem>>, vector<1x1x128xf32>
    %63 = vector.shape_cast %62 : vector<1x1x128xf32> to vector<1x128xf32>
    %64 = vector.broadcast %63 : vector<1x128xf32> to vector<16x128xf32>
    %65 = arith.addf %61, %64 : vector<16x128xf32>
    %c64_i32 = arith.constant 64 : i32
    %66 = tpu.dynamic_rotate %65 by %c64_i32 dim 1 : vector<16x128xf32>, i32 -> vector<16x128xf32>
    %cst_37 = arith.constant 5.000000e-01 : f32
    %67 = vector.broadcast %cst_37 : f32 to vector<16x128xf32>
    %68 = arith.mulf %67, %66 : vector<16x128xf32>
    %69 = math.exp %68 : vector<16x128xf32>
    %70 = arith.mulf %13, %69 : vector<16x128xf32>
    %71 = arith.addf %65, %70 : vector<16x128xf32>
    %72 = arith.addf %71, %38 : vector<16x128xf32>
    %73 = arith.truncf %72 : vector<16x128xf32> to vector<16x128xbf16>
    %c5 = arith.constant 5 : index
    %c0_38 = arith.constant 0 : index
    %c0_39 = arith.constant 0 : index
    %74 = vector.load %arg4[%c5, %c0_38, %c0_39] : memref<8x128x128xbf16, #tpu.memory_space<vmem>>, vector<1x128x128xbf16>
    %75 = vector.shape_cast %74 : vector<1x128x128xbf16> to vector<128x128xbf16>
    %cst_40 = arith.constant dense<0.000000e+00> : vector<16x128xf32>
    %76 = tpu.matmul %73, %75, %cst_40 {dimension_numbers = #tpu.dot_dimension_numbers<[1], [0], [0], [1], [0, 0, 1, 1], [], []>} : vector<16x128xbf16>, vector<128x128xbf16>, vector<16x128xf32> -> vector<16x128xf32>
    %c5_41 = arith.constant 5 : index
    %c0_42 = arith.constant 0 : index
    %c0_43 = arith.constant 0 : index
    %77 = vector.load %arg5[%c5_41, %c0_42, %c0_43] : memref<8x1x128xf32, #tpu.memory_space<vmem>>, vector<1x1x128xf32>
    %78 = vector.shape_cast %77 : vector<1x1x128xf32> to vector<1x128xf32>
    %79 = vector.broadcast %78 : vector<1x128xf32> to vector<16x128xf32>
    %80 = arith.addf %76, %79 : vector<16x128xf32>
    %81 = math.tanh %80 : vector<16x128xf32>
    %82 = arith.truncf %81 : vector<16x128xf32> to vector<16x128xbf16>
    %c6 = arith.constant 6 : index
    %c0_44 = arith.constant 0 : index
    %c0_45 = arith.constant 0 : index
    %83 = vector.load %arg4[%c6, %c0_44, %c0_45] : memref<8x128x128xbf16, #tpu.memory_space<vmem>>, vector<1x128x128xbf16>
    %84 = vector.shape_cast %83 : vector<1x128x128xbf16> to vector<128x128xbf16>
    %cst_46 = arith.constant dense<0.000000e+00> : vector<16x128xf32>
    %85 = tpu.matmul %82, %84, %cst_46 {dimension_numbers = #tpu.dot_dimension_numbers<[1], [0], [0], [1], [0, 0, 1, 1], [], []>} : vector<16x128xbf16>, vector<128x128xbf16>, vector<16x128xf32> -> vector<16x128xf32>
    %c6_47 = arith.constant 6 : index
    %c0_48 = arith.constant 0 : index
    %c0_49 = arith.constant 0 : index
    %86 = vector.load %arg5[%c6_47, %c0_48, %c0_49] : memref<8x1x128xf32, #tpu.memory_space<vmem>>, vector<1x1x128xf32>
    %87 = vector.shape_cast %86 : vector<1x1x128xf32> to vector<1x128xf32>
    %88 = vector.broadcast %87 : vector<1x128xf32> to vector<16x128xf32>
    %89 = arith.addf %85, %88 : vector<16x128xf32>
    %90 = math.tanh %89 : vector<16x128xf32>
    %91 = arith.truncf %90 : vector<16x128xf32> to vector<16x128xbf16>
    %c7 = arith.constant 7 : index
    %c0_50 = arith.constant 0 : index
    %c0_51 = arith.constant 0 : index
    %92 = vector.load %arg4[%c7, %c0_50, %c0_51] : memref<8x128x128xbf16, #tpu.memory_space<vmem>>, vector<1x128x128xbf16>
    %93 = vector.shape_cast %92 : vector<1x128x128xbf16> to vector<128x128xbf16>
    %cst_52 = arith.constant dense<0.000000e+00> : vector<16x128xf32>
    %94 = tpu.matmul %91, %93, %cst_52 {dimension_numbers = #tpu.dot_dimension_numbers<[1], [0], [0], [1], [0, 0, 1, 1], [], []>} : vector<16x128xbf16>, vector<128x128xbf16>, vector<16x128xf32> -> vector<16x128xf32>
    %c7_53 = arith.constant 7 : index
    %c0_54 = arith.constant 0 : index
    %c0_55 = arith.constant 0 : index
    %95 = vector.load %arg5[%c7_53, %c0_54, %c0_55] : memref<8x1x128xf32, #tpu.memory_space<vmem>>, vector<1x1x128xf32>
    %96 = vector.shape_cast %95 : vector<1x1x128xf32> to vector<1x128xf32>
    %97 = vector.broadcast %96 : vector<1x128xf32> to vector<16x128xf32>
    %98 = arith.addf %94, %97 : vector<16x128xf32>
    %c16 = arith.constant 16 : index
    %c0_56 = arith.constant 0 : index
    %99 = vector.load %arg1[%c16, %c0_56] : memref<32x128xf32, #tpu.memory_space<vmem>>, vector<16x128xf32>
    %c16_57 = arith.constant 16 : index
    %c0_58 = arith.constant 0 : index
    %100 = vector.load %arg2[%c16_57, %c0_58] : memref<32x128xf32, #tpu.memory_space<vmem>>, vector<16x128xf32>
    %c16_59 = arith.constant 16 : index
    %c0_60 = arith.constant 0 : index
    %101 = vector.load %arg3[%c16_59, %c0_60] : memref<32x128xf32, #tpu.memory_space<vmem>>, vector<16x128xf32>
    %102 = arith.truncf %100 : vector<16x128xf32> to vector<16x128xbf16>
    %c0_61 = arith.constant 0 : index
    %c0_62 = arith.constant 0 : index
    %c0_63 = arith.constant 0 : index
    %103 = vector.load %arg4[%c0_61, %c0_62, %c0_63] : memref<8x128x128xbf16, #tpu.memory_space<vmem>>, vector<1x128x128xbf16>
    %104 = vector.shape_cast %103 : vector<1x128x128xbf16> to vector<128x128xbf16>
    %cst_64 = arith.constant dense<0.000000e+00> : vector<16x128xf32>
    %105 = tpu.matmul %102, %104, %cst_64 {dimension_numbers = #tpu.dot_dimension_numbers<[1], [0], [0], [1], [0, 0, 1, 1], [], []>} : vector<16x128xbf16>, vector<128x128xbf16>, vector<16x128xf32> -> vector<16x128xf32>
    %c0_65 = arith.constant 0 : index
    %c0_66 = arith.constant 0 : index
    %c0_67 = arith.constant 0 : index
    %106 = vector.load %arg5[%c0_65, %c0_66, %c0_67] : memref<8x1x128xf32, #tpu.memory_space<vmem>>, vector<1x1x128xf32>
    %107 = vector.shape_cast %106 : vector<1x1x128xf32> to vector<1x128xf32>
    %108 = vector.broadcast %107 : vector<1x128xf32> to vector<16x128xf32>
    %109 = arith.addf %105, %108 : vector<16x128xf32>
    %110 = math.tanh %109 : vector<16x128xf32>
    %111 = arith.truncf %110 : vector<16x128xf32> to vector<16x128xbf16>
    %c1_68 = arith.constant 1 : index
    %c0_69 = arith.constant 0 : index
    %c0_70 = arith.constant 0 : index
    %112 = vector.load %arg4[%c1_68, %c0_69, %c0_70] : memref<8x128x128xbf16, #tpu.memory_space<vmem>>, vector<1x128x128xbf16>
    %113 = vector.shape_cast %112 : vector<1x128x128xbf16> to vector<128x128xbf16>
    %cst_71 = arith.constant dense<0.000000e+00> : vector<16x128xf32>
    %114 = tpu.matmul %111, %113, %cst_71 {dimension_numbers = #tpu.dot_dimension_numbers<[1], [0], [0], [1], [0, 0, 1, 1], [], []>} : vector<16x128xbf16>, vector<128x128xbf16>, vector<16x128xf32> -> vector<16x128xf32>
    %c1_72 = arith.constant 1 : index
    %c0_73 = arith.constant 0 : index
    %c0_74 = arith.constant 0 : index
    %115 = vector.load %arg5[%c1_72, %c0_73, %c0_74] : memref<8x1x128xf32, #tpu.memory_space<vmem>>, vector<1x1x128xf32>
    %116 = vector.shape_cast %115 : vector<1x1x128xf32> to vector<1x128xf32>
    %117 = vector.broadcast %116 : vector<1x128xf32> to vector<16x128xf32>
    %118 = arith.addf %114, %117 : vector<16x128xf32>
    %cst_75 = arith.constant 0.000000e+00 : f32
    %119 = vector.shape_cast %5 : vector<1x128xi1> to vector<1x128xi1>
    %120 = vector.broadcast %119 : vector<1x128xi1> to vector<16x128xi1>
    %121 = vector.broadcast %cst_75 : f32 to vector<16x128xf32>
    %122 = arith.select %120, %118, %121 : vector<16x128xi1>, vector<16x128xf32>
    %cst_76 = arith.constant 0.000000e+00 : f32
    %123 = vector.shape_cast %10 : vector<1x128xi1> to vector<1x128xi1>
    %124 = vector.broadcast %123 : vector<1x128xi1> to vector<16x128xi1>
    %125 = vector.broadcast %cst_76 : f32 to vector<16x128xf32>
    %126 = arith.select %124, %118, %125 : vector<16x128xi1>, vector<16x128xf32>
    %127 = arith.addf %99, %122 : vector<16x128xf32>
    %128 = arith.truncf %127 : vector<16x128xf32> to vector<16x128xbf16>
    %c2_77 = arith.constant 2 : index
    %c0_78 = arith.constant 0 : index
    %c0_79 = arith.constant 0 : index
    %129 = vector.load %arg4[%c2_77, %c0_78, %c0_79] : memref<8x128x128xbf16, #tpu.memory_space<vmem>>, vector<1x128x128xbf16>
    %130 = vector.shape_cast %129 : vector<1x128x128xbf16> to vector<128x128xbf16>
    %cst_80 = arith.constant dense<0.000000e+00> : vector<16x128xf32>
    %131 = tpu.matmul %128, %130, %cst_80 {dimension_numbers = #tpu.dot_dimension_numbers<[1], [0], [0], [1], [0, 0, 1, 1], [], []>} : vector<16x128xbf16>, vector<128x128xbf16>, vector<16x128xf32> -> vector<16x128xf32>
    %c2_81 = arith.constant 2 : index
    %c0_82 = arith.constant 0 : index
    %c0_83 = arith.constant 0 : index
    %132 = vector.load %arg5[%c2_81, %c0_82, %c0_83] : memref<8x1x128xf32, #tpu.memory_space<vmem>>, vector<1x1x128xf32>
    %133 = vector.shape_cast %132 : vector<1x1x128xf32> to vector<1x128xf32>
    %134 = vector.broadcast %133 : vector<1x128xf32> to vector<16x128xf32>
    %135 = arith.addf %131, %134 : vector<16x128xf32>
    %136 = math.tanh %135 : vector<16x128xf32>
    %137 = arith.truncf %136 : vector<16x128xf32> to vector<16x128xbf16>
    %c3_84 = arith.constant 3 : index
    %c0_85 = arith.constant 0 : index
    %c0_86 = arith.constant 0 : index
    %138 = vector.load %arg4[%c3_84, %c0_85, %c0_86] : memref<8x128x128xbf16, #tpu.memory_space<vmem>>, vector<1x128x128xbf16>
    %139 = vector.shape_cast %138 : vector<1x128x128xbf16> to vector<128x128xbf16>
    %cst_87 = arith.constant dense<0.000000e+00> : vector<16x128xf32>
    %140 = tpu.matmul %137, %139, %cst_87 {dimension_numbers = #tpu.dot_dimension_numbers<[1], [0], [0], [1], [0, 0, 1, 1], [], []>} : vector<16x128xbf16>, vector<128x128xbf16>, vector<16x128xf32> -> vector<16x128xf32>
    %c3_88 = arith.constant 3 : index
    %c0_89 = arith.constant 0 : index
    %c0_90 = arith.constant 0 : index
    %141 = vector.load %arg5[%c3_88, %c0_89, %c0_90] : memref<8x1x128xf32, #tpu.memory_space<vmem>>, vector<1x1x128xf32>
    %142 = vector.shape_cast %141 : vector<1x1x128xf32> to vector<1x128xf32>
    %143 = vector.broadcast %142 : vector<1x128xf32> to vector<16x128xf32>
    %144 = arith.addf %140, %143 : vector<16x128xf32>
    %145 = math.tanh %144 : vector<16x128xf32>
    %146 = arith.truncf %145 : vector<16x128xf32> to vector<16x128xbf16>
    %c4_91 = arith.constant 4 : index
    %c0_92 = arith.constant 0 : index
    %c0_93 = arith.constant 0 : index
    %147 = vector.load %arg4[%c4_91, %c0_92, %c0_93] : memref<8x128x128xbf16, #tpu.memory_space<vmem>>, vector<1x128x128xbf16>
    %148 = vector.shape_cast %147 : vector<1x128x128xbf16> to vector<128x128xbf16>
    %cst_94 = arith.constant dense<0.000000e+00> : vector<16x128xf32>
    %149 = tpu.matmul %146, %148, %cst_94 {dimension_numbers = #tpu.dot_dimension_numbers<[1], [0], [0], [1], [0, 0, 1, 1], [], []>} : vector<16x128xbf16>, vector<128x128xbf16>, vector<16x128xf32> -> vector<16x128xf32>
    %c4_95 = arith.constant 4 : index
    %c0_96 = arith.constant 0 : index
    %c0_97 = arith.constant 0 : index
    %150 = vector.load %arg5[%c4_95, %c0_96, %c0_97] : memref<8x1x128xf32, #tpu.memory_space<vmem>>, vector<1x1x128xf32>
    %151 = vector.shape_cast %150 : vector<1x1x128xf32> to vector<1x128xf32>
    %152 = vector.broadcast %151 : vector<1x128xf32> to vector<16x128xf32>
    %153 = arith.addf %149, %152 : vector<16x128xf32>
    %c64_i32_98 = arith.constant 64 : i32
    %154 = tpu.dynamic_rotate %153 by %c64_i32_98 dim 1 : vector<16x128xf32>, i32 -> vector<16x128xf32>
    %cst_99 = arith.constant 5.000000e-01 : f32
    %155 = vector.broadcast %cst_99 : f32 to vector<16x128xf32>
    %156 = arith.mulf %155, %154 : vector<16x128xf32>
    %157 = math.exp %156 : vector<16x128xf32>
    %158 = arith.mulf %101, %157 : vector<16x128xf32>
    %159 = arith.addf %153, %158 : vector<16x128xf32>
    %160 = arith.addf %159, %126 : vector<16x128xf32>
    %161 = arith.truncf %160 : vector<16x128xf32> to vector<16x128xbf16>
    %c5_100 = arith.constant 5 : index
    %c0_101 = arith.constant 0 : index
    %c0_102 = arith.constant 0 : index
    %162 = vector.load %arg4[%c5_100, %c0_101, %c0_102] : memref<8x128x128xbf16, #tpu.memory_space<vmem>>, vector<1x128x128xbf16>
    %163 = vector.shape_cast %162 : vector<1x128x128xbf16> to vector<128x128xbf16>
    %cst_103 = arith.constant dense<0.000000e+00> : vector<16x128xf32>
    %164 = tpu.matmul %161, %163, %cst_103 {dimension_numbers = #tpu.dot_dimension_numbers<[1], [0], [0], [1], [0, 0, 1, 1], [], []>} : vector<16x128xbf16>, vector<128x128xbf16>, vector<16x128xf32> -> vector<16x128xf32>
    %c5_104 = arith.constant 5 : index
    %c0_105 = arith.constant 0 : index
    %c0_106 = arith.constant 0 : index
    %165 = vector.load %arg5[%c5_104, %c0_105, %c0_106] : memref<8x1x128xf32, #tpu.memory_space<vmem>>, vector<1x1x128xf32>
    %166 = vector.shape_cast %165 : vector<1x1x128xf32> to vector<1x128xf32>
    %167 = vector.broadcast %166 : vector<1x128xf32> to vector<16x128xf32>
    %168 = arith.addf %164, %167 : vector<16x128xf32>
    %169 = math.tanh %168 : vector<16x128xf32>
    %170 = arith.truncf %169 : vector<16x128xf32> to vector<16x128xbf16>
    %c6_107 = arith.constant 6 : index
    %c0_108 = arith.constant 0 : index
    %c0_109 = arith.constant 0 : index
    %171 = vector.load %arg4[%c6_107, %c0_108, %c0_109] : memref<8x128x128xbf16, #tpu.memory_space<vmem>>, vector<1x128x128xbf16>
    %172 = vector.shape_cast %171 : vector<1x128x128xbf16> to vector<128x128xbf16>
    %cst_110 = arith.constant dense<0.000000e+00> : vector<16x128xf32>
    %173 = tpu.matmul %170, %172, %cst_110 {dimension_numbers = #tpu.dot_dimension_numbers<[1], [0], [0], [1], [0, 0, 1, 1], [], []>} : vector<16x128xbf16>, vector<128x128xbf16>, vector<16x128xf32> -> vector<16x128xf32>
    %c6_111 = arith.constant 6 : index
    %c0_112 = arith.constant 0 : index
    %c0_113 = arith.constant 0 : index
    %174 = vector.load %arg5[%c6_111, %c0_112, %c0_113] : memref<8x1x128xf32, #tpu.memory_space<vmem>>, vector<1x1x128xf32>
    %175 = vector.shape_cast %174 : vector<1x1x128xf32> to vector<1x128xf32>
    %176 = vector.broadcast %175 : vector<1x128xf32> to vector<16x128xf32>
    %177 = arith.addf %173, %176 : vector<16x128xf32>
    %178 = math.tanh %177 : vector<16x128xf32>
    %179 = arith.truncf %178 : vector<16x128xf32> to vector<16x128xbf16>
    %c7_114 = arith.constant 7 : index
    %c0_115 = arith.constant 0 : index
    %c0_116 = arith.constant 0 : index
    %180 = vector.load %arg4[%c7_114, %c0_115, %c0_116] : memref<8x128x128xbf16, #tpu.memory_space<vmem>>, vector<1x128x128xbf16>
    %181 = vector.shape_cast %180 : vector<1x128x128xbf16> to vector<128x128xbf16>
    %cst_117 = arith.constant dense<0.000000e+00> : vector<16x128xf32>
    %182 = tpu.matmul %179, %181, %cst_117 {dimension_numbers = #tpu.dot_dimension_numbers<[1], [0], [0], [1], [0, 0, 1, 1], [], []>} : vector<16x128xbf16>, vector<128x128xbf16>, vector<16x128xf32> -> vector<16x128xf32>
    %c7_118 = arith.constant 7 : index
    %c0_119 = arith.constant 0 : index
    %c0_120 = arith.constant 0 : index
    %183 = vector.load %arg5[%c7_118, %c0_119, %c0_120] : memref<8x1x128xf32, #tpu.memory_space<vmem>>, vector<1x1x128xf32>
    %184 = vector.shape_cast %183 : vector<1x1x128xf32> to vector<1x128xf32>
    %185 = vector.broadcast %184 : vector<1x128xf32> to vector<16x128xf32>
    %186 = arith.addf %182, %185 : vector<16x128xf32>
    %c0_121 = arith.constant 0 : index
    %c0_122 = arith.constant 0 : index
    %187 = vector.load %arg6[%c0_121, %c0_122] : memref<32x384xf32, #tpu.memory_space<vmem>>, vector<16x128xf32>
    tpu.vector_store %arg6[%c0_121, %c0_122], %98 {strides = array<i32>} : memref<32x384xf32, #tpu.memory_space<vmem>>, vector<16x128xf32>,
    %c0_123 = arith.constant 0 : index
    %c128 = arith.constant 128 : index
    %188 = vector.load %arg6[%c0_123, %c128] : memref<32x384xf32, #tpu.memory_space<vmem>>, vector<16x128xf32>
    tpu.vector_store %arg6[%c0_123, %c128], %65 {strides = array<i32>} : memref<32x384xf32, #tpu.memory_space<vmem>>, vector<16x128xf32>,
    %c0_124 = arith.constant 0 : index
    %c256 = arith.constant 256 : index
    %189 = vector.load %arg6[%c0_124, %c256] : memref<32x384xf32, #tpu.memory_space<vmem>>, vector<16x128xf32>
    tpu.vector_store %arg6[%c0_124, %c256], %66 {strides = array<i32>} : memref<32x384xf32, #tpu.memory_space<vmem>>, vector<16x128xf32>,
    %c16_125 = arith.constant 16 : index
    %c0_126 = arith.constant 0 : index
    %190 = vector.load %arg6[%c16_125, %c0_126] : memref<32x384xf32, #tpu.memory_space<vmem>>, vector<16x128xf32>
    tpu.vector_store %arg6[%c16_125, %c0_126], %186 {strides = array<i32>} : memref<32x384xf32, #tpu.memory_space<vmem>>, vector<16x128xf32>,
    %c16_127 = arith.constant 16 : index
    %c128_128 = arith.constant 128 : index
    %191 = vector.load %arg6[%c16_127, %c128_128] : memref<32x384xf32, #tpu.memory_space<vmem>>, vector<16x128xf32>
    tpu.vector_store %arg6[%c16_127, %c128_128], %153 {strides = array<i32>} : memref<32x384xf32, #tpu.memory_space<vmem>>, vector<16x128xf32>,
    %c16_129 = arith.constant 16 : index
    %c256_130 = arith.constant 256 : index
    %192 = vector.load %arg6[%c16_129, %c256_130] : memref<32x384xf32, #tpu.memory_space<vmem>>, vector<16x128xf32>
    tpu.vector_store %arg6[%c16_129, %c256_130], %154 {strides = array<i32>} : memref<32x384xf32, #tpu.memory_space<vmem>>, vector<16x128xf32>,
    return
  }
  func.func @transform_0(%arg0: i32) -> (i32, i32) {
    %c0_i32 = arith.constant 0 : i32
    %c0_i32_0 = arith.constant 0 : i32
    return %arg0, %c0_i32 : i32, i32
  }
  func.func @transform_1(%arg0: i32) -> (i32, i32) {
    %c0_i32 = arith.constant 0 : i32
    %c0_i32_0 = arith.constant 0 : i32
    return %arg0, %c0_i32 : i32, i32
  }
  func.func @transform_2(%arg0: i32) -> (i32, i32) {
    %c0_i32 = arith.constant 0 : i32
    %c0_i32_0 = arith.constant 0 : i32
    return %arg0, %c0_i32 : i32, i32
  }
  func.func @transform_3(%arg0: i32) -> (i32, i32, i32) {
    %c0_i32 = arith.constant 0 : i32
    %c0_i32_0 = arith.constant 0 : i32
    %c0_i32_1 = arith.constant 0 : i32
    %c0_i32_2 = arith.constant 0 : i32
    return %c0_i32, %c0_i32_0, %c0_i32_1 : i32, i32, i32
  }
  func.func @transform_4(%arg0: i32) -> (i32, i32, i32) {
    %c0_i32 = arith.constant 0 : i32
    %c0_i32_0 = arith.constant 0 : i32
    %c0_i32_1 = arith.constant 0 : i32
    %c0_i32_2 = arith.constant 0 : i32
    return %c0_i32, %c0_i32_0, %c0_i32_1 : i32, i32, i32
  }
  func.func @transform_5(%arg0: i32) -> (i32, i32) {
    %c0_i32 = arith.constant 0 : i32
    %c0_i32_0 = arith.constant 0 : i32
    return %arg0, %c0_i32 : i32, i32
  }
}

</mosaic_0001>

<llo_original>
// kernel: tpu_custom_call.1
$region0: #{tpu_custom_call.1}
  #allocation0 [shape = 'u32[]', space=smem, size = 0x4, offset = 0x4, fixed_abs, tag = 'smem constant byte address 0x4 - core index']
  #allocation1 [shape = 'u32[144,128]{1,0:T(1,128)}', space=vmem, size = 0x12000, scoped, tag = 'internal scratch']
  %s0 = inlined_call_operand.hbm [shape: f32[64,128], index: 0, kind: input, shape index: {}]
  %s1 = inlined_call_operand.hbm [shape: f32[64,128], index: 1, kind: input, shape index: {}]
  %s2 = inlined_call_operand.hbm [shape: f32[64,128], index: 2, kind: input, shape index: {}]
  %s3 = inlined_call_operand.hbm [shape: bf16[8,128,128], index: 3, kind: input, shape index: {}]
  %s4 = inlined_call_operand.vmem [shape: f32[8,1,128], index: 4, kind: input, shape index: {}]
  %s5 = inlined_call_operand.hbm [shape: f32[64,384], index: 5, kind: output, shape index: {}]
  %s6 = sld [smem:[#allocation0]]
  $region69: #{tpu_custom_call.1} parent=0
    _
  %s8 = ssub.s32 1, %s6
  %s9 = scalar_select 0, %s8, %s6
  $region1: #{tpu_custom_call.1} parent=0
    #allocation2 [shape = 'u8[32768]{0}', space=vmem, size = 0x8000, scoped, tag = 'input window, operand 0']
    #allocation3 [shape = 's32[2]{0}', space=sflag, size = 0x8, scoped, tag = 'scoped memory for tpu_custom_call.1']
    #allocation4 [shape = 's32[2]{0}', space=sflag, size = 0x8, scoped, tag = 'scoped memory for tpu_custom_call.1']
    #allocation5 [shape = 'u8[32768]{0}', space=vmem, size = 0x8000, scoped, tag = 'input window, operand 1']
    #allocation6 [shape = 's32[2]{0}', space=sflag, size = 0x8, scoped, tag = 'scoped memory for tpu_custom_call.1']
    #allocation7 [shape = 'u8[32768]{0}', space=vmem, size = 0x8000, scoped, tag = 'input window, operand 2']
    #allocation8 [shape = 'u8[262144]{0}', space=vmem, size = 0x40000, scoped, tag = 'input window, operand 3, single buffered']
    #allocation9 [shape = 's32[1]{0}', space=sflag, size = 0x4, scoped, tag = 'scoped memory for tpu_custom_call.1']
    #allocation10 [shape = 'u8[98304]{0}', space=vmem, size = 0x18000, scoped, tag = 'output window, operand 0']
    %10 = vsyncpa [#allocation3], 0
    %s11 = scalar_lea.sflag [#allocation3], 1
    %12 = vsyncpa %s11, 0
    %13 = vsyncpa [#allocation6], 0
    %s14 = scalar_lea.sflag [#allocation6], 1
    %15 = vsyncpa %s14, 0
    %16 = vsyncpa [#allocation9], 0
    %17 = vsyncpa [#allocation4], 0
    %s18 = scalar_lea.sflag [#allocation4], 1
    %19 = vsyncpa %s18, 0
    loop: start=0, step=1, limit=4
    $region2: #{tpu_custom_call.1} parent=1 // loop_pre_header
      _
    $region3: #{tpu_custom_call.1} parent=1 // loop_header
      %s21 = sphi 0, %s25
      %p22 = scmp.ge.s32.totalorder %s21, 4
      %s31 = sphi 0, %s33
      %s34 = sphi 0, %s31
      %s35 = sphi 0, %s34
      %s51 = sphi 0, %s35
      %s57 = sphi 0, %s59
      %s60 = sphi 0, %s57
      %s61 = sphi 0, %s60
      %s77 = sphi 0, %s61
      %s83 = sphi 0, %s85
      %s86 = sphi 0, %s83
      %s87 = sphi 0, %s86
      %s103 = sphi 0, %s87
      %s107 = sphi 0, %s107
      %s109 = sphi 0, %s107
      %s110 = sphi 0, %s109
      %s124 = sphi 0, %s110
      %s128 = sphi 0, %s128
      %s130 = sphi 0, %s128
      %s131 = sphi 0, %s130
      %s145 = sphi 0, %s131
      %s151 = sphi 0, %s153
      %s154 = sphi 0, %s151
      %s155 = sphi 0, %s154
      %s171 = sphi 0, %s155
    $region4: #{tpu_custom_call.1} parent=1 // loop_header_branch
      %24 = sbr.rel (%p22) target = $region8
    $region5: #{tpu_custom_call.1} parent=1 // loop_body
      %s26 = ssub.s32 %s21, 1
      %s27 = ssub.s32 %s21, 2
      %s28 = sadd.s32 %s21, 1
      %s29 = ssub.s32 %s21, %s28
      %p30 = scmp.eq.s32.totalorder %s29, 0
      %s32 = sadd.s32 %s31, 1
      %s33 = scalar_select %p30, %s31, %s32
      %p36 = pneg %p30
      %p37 = scmp.eq.s32.totalorder %s21, 1
      %p38 = por %p36, %p37
      %p39 = scmp.ne.s32.totalorder %s31, %s34
      %p40 = scmp.eq.s32.totalorder %s21, 0
      %p41 = por %p39, %p40
      %p42 = scmp.ne.s32.totalorder %s31, %s34
      %p43 = scmp.eq.s32.totalorder %s26, 1
      %p44 = por %p42, %p43
      %p45 = scmp.ne.s32.totalorder %s34, %s35
      %p46 = scmp.eq.s32.totalorder %s26, 0
      %p47 = por %p45, %p46
      %p48 = scmp.ne.s32.totalorder %s34, %s35
      %p49 = scmp.eq.s32.totalorder %s27, 1
      %p50 = por %p48, %p49
      %p52 = scmp.ne.s32.totalorder %s35, %s51
      %p53 = scmp.eq.s32.totalorder %s27, 0
      %p54 = por %p52, %p53
      %s55 = ssub.s32 %s21, %s28
      %p56 = scmp.eq.s32.totalorder %s55, 0
      %s58 = sadd.s32 %s57, 1
      %s59 = scalar_select %p56, %s57, %s58
      %p62 = pneg %p56
      %p63 = scmp.eq.s32.totalorder %s21, 1
      %p64 = por %p62, %p63
      %p65 = scmp.ne.s32.totalorder %s57, %s60
      %p66 = scmp.eq.s32.totalorder %s21, 0
      %p67 = por %p65, %p66
      %p68 = scmp.ne.s32.totalorder %s57, %s60
      %p69 = scmp.eq.s32.totalorder %s26, 1
      %p70 = por %p68, %p69
      %p71 = scmp.ne.s32.totalorder %s60, %s61
      %p72 = scmp.eq.s32.totalorder %s26, 0
      %p73 = por %p71, %p72
      %p74 = scmp.ne.s32.totalorder %s60, %s61
      %p75 = scmp.eq.s32.totalorder %s27, 1
      %p76 = por %p74, %p75
      %p78 = scmp.ne.s32.totalorder %s61, %s77
      %p79 = scmp.eq.s32.totalorder %s27, 0
      %p80 = por %p78, %p79
      %s81 = ssub.s32 %s21, %s28
      %p82 = scmp.eq.s32.totalorder %s81, 0
      %s84 = sadd.s32 %s83, 1
      %s85 = scalar_select %p82, %s83, %s84
      %p88 = pneg %p82
      %p89 = scmp.eq.s32.totalorder %s21, 1
      %p90 = por %p88, %p89
      %p91 = scmp.ne.s32.totalorder %s83, %s86
      %p92 = scmp.eq.s32.totalorder %s21, 0
      %p93 = por %p91, %p92
      %p94 = scmp.ne.s32.totalorder %s83, %s86
      %p95 = scmp.eq.s32.totalorder %s26, 1
      %p96 = por %p94, %p95
      %p97 = scmp.ne.s32.totalorder %s86, %s87
      %p98 = scmp.eq.s32.totalorder %s26, 0
      %p99 = por %p97, %p98
      %p100 = scmp.ne.s32.totalorder %s86, %s87
      %p101 = scmp.eq.s32.totalorder %s27, 1
      %p102 = por %p100, %p101
      %p104 = scmp.ne.s32.totalorder %s87, %s103
      %p105 = scmp.eq.s32.totalorder %s27, 0
      %p106 = por %p104, %p105
      %s108 = sadd.s32 %s107, 1
      %p111 = scmp.eq.s32.totalorder %s21, 1
      %p112 = scmp.ne.s32.totalorder %s107, %s109
      %p113 = scmp.eq.s32.totalorder %s21, 0
      %p114 = por %p112, %p113
      %p115 = scmp.ne.s32.totalorder %s107, %s109
      %p116 = scmp.eq.s32.totalorder %s26, 1
      %p117 = por %p115, %p116
      %p118 = scmp.ne.s32.totalorder %s109, %s110
      %p119 = scmp.eq.s32.totalorder %s26, 0
      %p120 = por %p118, %p119
      %p121 = scmp.ne.s32.totalorder %s109, %s110
      %p122 = scmp.eq.s32.totalorder %s27, 1
      %p123 = por %p121, %p122
      %p125 = scmp.ne.s32.totalorder %s110, %s124
      %p126 = scmp.eq.s32.totalorder %s27, 0
      %p127 = por %p125, %p126
      %s129 = sadd.s32 %s128, 1
      %p132 = scmp.eq.s32.totalorder %s21, 1
      %p133 = scmp.ne.s32.totalorder %s128, %s130
      %p134 = scmp.eq.s32.totalorder %s21, 0
      %p135 = por %p133, %p134
      %p136 = scmp.ne.s32.totalorder %s128, %s130
      %p137 = scmp.eq.s32.totalorder %s26, 1
      %p138 = por %p136, %p137
      %p139 = scmp.ne.s32.totalorder %s130, %s131
      %p140 = scmp.eq.s32.totalorder %s26, 0
      %p141 = por %p139, %p140
      %p142 = scmp.ne.s32.totalorder %s130, %s131
      %p143 = scmp.eq.s32.totalorder %s27, 1
      %p144 = por %p142, %p143
      %p146 = scmp.ne.s32.totalorder %s131, %s145
      %p147 = scmp.eq.s32.totalorder %s27, 0
      %p148 = por %p146, %p147
      %s149 = ssub.s32 %s21, %s28
      %p150 = scmp.eq.s32.totalorder %s149, 0
      %s152 = sadd.s32 %s151, 1
      %s153 = scalar_select %p150, %s151, %s152
      %p156 = pneg %p150
      %p157 = scmp.eq.s32.totalorder %s21, 1
      %p158 = por %p156, %p157
      %p159 = scmp.ne.s32.totalorder %s151, %s154
      %p160 = scmp.eq.s32.totalorder %s21, 0
      %p161 = por %p159, %p160
      %p162 = scmp.ne.s32.totalorder %s151, %s154
      %p163 = scmp.eq.s32.totalorder %s26, 1
      %p164 = por %p162, %p163
      %p165 = scmp.ne.s32.totalorder %s154, %s155
      %p166 = scmp.eq.s32.totalorder %s26, 0
      %p167 = por %p165, %p166
      %p168 = scmp.ne.s32.totalorder %s154, %s155
      %p169 = scmp.eq.s32.totalorder %s27, 1
      %p170 = por %p168, %p169
      %p172 = scmp.ne.s32.totalorder %s155, %s171
      %p173 = scmp.eq.s32.totalorder %s27, 0
      %p174 = por %p172, %p173
      %p175 = scmp.le.s32.totalorder 1, %s21
      %p176 = scmp.lt.s32.totalorder %s21, 3
      %p177 = pnand %p175, %p176
      %p178 = pneg %p177
      // Predicated region
      $region9: #{tpu_custom_call.1} parent=5 // pred_check
        _
      $region10: #{tpu_custom_call.1} parent=5 // pred_check_branch
        %180 = sbr.rel (%p177) target = $region12
      $region11: #{tpu_custom_call.1} parent=5 // pred_region
        %s181 = ssub.s32 %s21, 1
        // Predicated region
        $region13: #{tpu_custom_call.1} parent=11 // pred_check
          %p182 = pneg %p120
        $region14: #{tpu_custom_call.1} parent=11 // pred_check_branch
          %184 = sbr.rel (%p182) target = $region16
        $region15: #{tpu_custom_call.1} parent=11 // pred_region
          %s186 = ssub.s32 8192, 8192
          %187 = vsyncadd [#allocation9], %s186
          %s188 = sshll.u32 [#allocation8], 4
          %s189 = int_to_ptr.vmem [resolvable:$true] %s188
          %194 = dma.hbm_to_vmem [thread:$0]  %s3, 8192, %s189, [#allocation9], 64, 64, 4
        $region16: #{tpu_custom_call.1} parent=11 // pred_fallthru
          _
        // Predicated region
        $region17: #{tpu_custom_call.1} parent=11 // pred_check
          %p195 = pneg %p141
        $region18: #{tpu_custom_call.1} parent=11 // pred_check_branch
          %197 = sbr.rel (%p195) target = $region20
        $region19: #{tpu_custom_call.1} parent=11 // pred_region
          _
        $region20: #{tpu_custom_call.1} parent=11 // pred_fallthru
          _
      $region12: #{tpu_custom_call.1} parent=5 // pred_fallthru
        _
      %p198 = scmp.lt.s32.totalorder %s21, 2
      // Predicated region
      $region21: #{tpu_custom_call.1} parent=5 // pred_check
        %p199 = pneg %p198
      $region22: #{tpu_custom_call.1} parent=5 // pred_check_branch
        %201 = sbr.rel (%p199) target = $region24
      $region23: #{tpu_custom_call.1} parent=5 // pred_region
        // Predicated region
        $region25: #{tpu_custom_call.1} parent=23 // pred_check
          %p202 = pneg %p41
        $region26: #{tpu_custom_call.1} parent=23 // pred_check_branch
          %204 = sbr.rel (%p202) target = $region28
        $region27: #{tpu_custom_call.1} parent=23 // pred_region
          %s205 = sand.u32 %s31, 1
          %s206 = scalar_lea.sflag [#allocation3], %s205
          %s207 = sand.u32 %s31, 1
          %s208 = smul.addr %s207, 32
          %s209 = scalar_lea.vmem [#allocation2], %s208
          %s210 = smul.u32 4, %s21
          %s212 = ssub.s32 512, 512
          %213 = vsyncadd %s206, %s212
          %s214 = smul.addr %s210, 128
          %s215 = scalar_lea.hbm %s0, %s214
          %s216 = sshll.u32 %s209, 4
          %s217 = int_to_ptr.vmem [resolvable:$true] %s216
          %222 = dma.hbm_to_vmem [thread:$0]  %s215, 512, %s217, %s206, 128, 128, 8
        $region28: #{tpu_custom_call.1} parent=23 // pred_fallthru
          _
        // Predicated region
        $region29: #{tpu_custom_call.1} parent=23 // pred_check
          %p223 = pneg %p67
        $region30: #{tpu_custom_call.1} parent=23 // pred_check_branch
          %225 = sbr.rel (%p223) target = $region32
        $region31: #{tpu_custom_call.1} parent=23 // pred_region
          %s226 = sand.u32 %s21, 1
          %s227 = scalar_lea.sflag [#allocation6], %s226
          %s228 = sand.u32 %s57, 1
          %s229 = smul.addr %s228, 32
          %s230 = scalar_lea.vmem [#allocation5], %s229
          %s231 = smul.u32 4, %s21
          %s233 = ssub.s32 512, 512
          %234 = vsyncadd %s227, %s233
          %s235 = smul.addr %s231, 128
          %s236 = scalar_lea.hbm %s1, %s235
          %s237 = sshll.u32 %s230, 4
          %s238 = int_to_ptr.vmem [resolvable:$true] %s237
          %243 = dma.hbm_to_vmem [thread:$0]  %s236, 512, %s238, %s227, 128, 128, 8
        $region32: #{tpu_custom_call.1} parent=23 // pred_fallthru
          _
        // Predicated region
        $region33: #{tpu_custom_call.1} parent=23 // pred_check
          %p244 = pneg %p93
        $region34: #{tpu_custom_call.1} parent=23 // pred_check_branch
          %246 = sbr.rel (%p244) target = $region36
        $region35: #{tpu_custom_call.1} parent=23 // pred_region
          %s247 = sand.u32 %s21, 1
          %s248 = scalar_lea.sflag [#allocation6], %s247
          %s249 = sand.u32 %s83, 1
          %s250 = smul.addr %s249, 32
          %s251 = scalar_lea.vmem [#allocation7], %s250
          %s252 = smul.u32 4, %s21
          %s254 = ssub.s32 512, 512
          %255 = vsyncadd %s248, %s254
          %s256 = smul.addr %s252, 128
          %s257 = scalar_lea.hbm %s2, %s256
          %s258 = sshll.u32 %s251, 4
          %s259 = int_to_ptr.vmem [resolvable:$true] %s258
          %264 = dma.hbm_to_vmem [thread:$0]  %s257, 512, %s259, %s248, 128, 128, 8
        $region36: #{tpu_custom_call.1} parent=23 // pred_fallthru
          _
      $region24: #{tpu_custom_call.1} parent=5 // pred_fallthru
        _
      %p265 = scmp.le.s32.totalorder 1, %s21
      %p266 = scmp.lt.s32.totalorder %s21, 3
      %p267 = pnand %p265, %p266
      %p268 = pneg %p267
      // Predicated region
      $region37: #{tpu_custom_call.1} parent=5 // pred_check
        _
      $region38: #{tpu_custom_call.1} parent=5 // pred_check_branch
        %270 = sbr.rel (%p267) target = $region40
      $region39: #{tpu_custom_call.1} parent=5 // pred_region
        %s271 = ssub.s32 %s21, 1
        %s272 = sand.u32 %s34, 1
        %s273 = scalar_lea.sflag [#allocation3], %s272
        %s274 = sand.u32 %s34, 1
        %s275 = smul.addr %s274, 32
        %s276 = scalar_lea.vmem [#allocation2], %s275
        // Predicated region
        $region41: #{tpu_custom_call.1} parent=39 // pred_check
          %p277 = pneg %p47
        $region42: #{tpu_custom_call.1} parent=39 // pred_check_branch
          %279 = sbr.rel (%p277) target = $region44
        $region43: #{tpu_custom_call.1} parent=39 // pred_region
          %280 = dma.done %s273, 512
        $region44: #{tpu_custom_call.1} parent=39 // pred_fallthru
          _
        %s281 = sand.u32 %s26, 1
        %s282 = scalar_lea.sflag [#allocation6], %s281
        %s283 = sand.u32 %s60, 1
        %s284 = smul.addr %s283, 32
        %s285 = scalar_lea.vmem [#allocation5], %s284
        // Predicated region
        $region45: #{tpu_custom_call.1} parent=39 // pred_check
          %p286 = pneg %p73
        $region46: #{tpu_custom_call.1} parent=39 // pred_check_branch
          %288 = sbr.rel (%p286) target = $region48
        $region47: #{tpu_custom_call.1} parent=39 // pred_region
          %289 = dma.done %s282, 512
        $region48: #{tpu_custom_call.1} parent=39 // pred_fallthru
          _
        %s290 = sand.u32 %s26, 1
        %s291 = scalar_lea.sflag [#allocation6], %s290
        %s292 = sand.u32 %s86, 1
        %s293 = smul.addr %s292, 32
        %s294 = scalar_lea.vmem [#allocation7], %s293
        // Predicated region
        $region49: #{tpu_custom_call.1} parent=39 // pred_check
          %p295 = pneg %p99
        $region50: #{tpu_custom_call.1} parent=39 // pred_check_branch
          %297 = sbr.rel (%p295) target = $region52
        $region51: #{tpu_custom_call.1} parent=39 // pred_region
          %298 = dma.done %s291, 512
        $region52: #{tpu_custom_call.1} parent=39 // pred_fallthru
          _
        // Predicated region
        $region53: #{tpu_custom_call.1} parent=39 // pred_check
          %p299 = pneg %p120
        $region54: #{tpu_custom_call.1} parent=39 // pred_check_branch
          %301 = sbr.rel (%p299) target = $region56
        $region55: #{tpu_custom_call.1} parent=39 // pred_region
          %302 = dma.done [#allocation9], 8192
        $region56: #{tpu_custom_call.1} parent=39 // pred_fallthru
          _
        %s303 = sand.u32 %s34, 1
        %s304 = scalar_lea.sflag [#allocation3], %s303
        %s305 = sand.u32 %s34, 1
        %s306 = smul.addr %s305, 32
        %s307 = scalar_lea.vmem [#allocation2], %s306
        %p308 = pneg %p47
        %p309 = pneg %p44
        %s310 = sand.u32 %s26, 1
        %s311 = scalar_lea.sflag [#allocation6], %s310
        %s312 = sand.u32 %s60, 1
        %s313 = smul.addr %s312, 32
        %s314 = scalar_lea.vmem [#allocation5], %s313
        %p315 = pneg %p73
        %p316 = pneg %p70
        %s317 = sand.u32 %s26, 1
        %s318 = scalar_lea.sflag [#allocation6], %s317
        %s319 = sand.u32 %s86, 1
        %s320 = smul.addr %s319, 32
        %s321 = scalar_lea.vmem [#allocation7], %s320
        %p322 = pneg %p99
        %p323 = pneg %p96
        %p324 = pneg %p120
        %p325 = pneg %p117
        %p326 = pneg %p141
        %p327 = pneg %p138
        %p328 = pneg %p167
        %p329 = pneg %p164
        %s330 = sand.u32 %s154, 1
        %s331 = scalar_lea.sflag [#allocation4], %s330
        %s332 = sand.u32 %s154, 1
        %s333 = smul.addr %s332, 96
        %s334 = scalar_lea.vmem [#allocation10], %s333
        %s335 = smul.u32 4, %s26
        %s336 = smul.u32 4, %s26
        %s337 = smul.u32 4, %s26
        %s338 = smul.u32 4, %s26
        %v340 = vlaneseq
        %v341 = vand.u32 %v340, 127
        %vm342 = vcmp.ge.s32.totalorder %v341, 16
        %vm343 = vcmp.lt.s32.totalorder %v341, 20
        %vm344 = vmand %vm342, %vm343
        %vm345 = vcmp.ge.s32.totalorder %v341, 8
        %vm346 = vcmp.lt.s32.totalorder %v341, 12
        %vm347 = vmand %vm345, %vm346
        %v348 = vld [vmem:[%s276] sm:$0xff]
        %v349 = vld [vmem:[%s276 + $0x8] sm:$0xff]
        %v350 = vld [vmem:[%s285] sm:$0xff]
        %v351 = vld [vmem:[%s285 + $0x8] sm:$0xff]
        %v352 = vld [vmem:[%s294] sm:$0xff]
        %v353 = vld [vmem:[%s294 + $0x8] sm:$0xff]
        %v354 = vpack.c.bf16 %v351, %v350
        %v355 = vld [vmem:[#allocation8] sm:$0xf]
        %v356 = vld [vmem:[#allocation8 + $0x4] sm:$0xf]
        %v357 = vld [vmem:[#allocation8 + $0x8] sm:$0xf]
        %v358 = vld [vmem:[#allocation8 + $0xc] sm:$0xf]
        %v359 = vld [vmem:[#allocation8 + $0x10] sm:$0xf]
        %v360 = vld [vmem:[#allocation8 + $0x14] sm:$0xf]
        %v361 = vld [vmem:[#allocation8 + $0x18] sm:$0xf]
        %v362 = vld [vmem:[#allocation8 + $0x1c] sm:$0xf]
        %v363 = vld [vmem:[#allocation8 + $0x20] sm:$0xf]
        %v364 = vld [vmem:[#allocation8 + $0x24] sm:$0xf]
        %v365 = vld [vmem:[#allocation8 + $0x28] sm:$0xf]
        %v366 = vld [vmem:[#allocation8 + $0x2c] sm:$0xf]
        %v367 = vld [vmem:[#allocation8 + $0x30] sm:$0xf]
        %v368 = vld [vmem:[#allocation8 + $0x34] sm:$0xf]
        %v369 = vld [vmem:[#allocation8 + $0x38] sm:$0xf]
        %v370 = vld [vmem:[#allocation8 + $0x3c] sm:$0xf]
        %v371 = vld [vmem:[%s4] sm:$0x1]
        %v373 = vlaneseq
        %v374 = vshrl.u32 %v373, 7
        %v375 = vsub.s32 0, %v374
        %v376 = vrot.slane %v371, %v375
        %v394 = vunpack.c.l.b16 %v355
        %v395 = vunpack.c.l.b16 %v356
        %v396 = vunpack.c.l.b16 %v357
        %v397 = vunpack.c.l.b16 %v358
        %v398 = vunpack.c.l.b16 %v359
        %v399 = vunpack.c.l.b16 %v360
        %v400 = vunpack.c.l.b16 %v361
        %v401 = vunpack.c.l.b16 %v362
        %v402 = vunpack.c.l.b16 %v363
        %v403 = vunpack.c.l.b16 %v364
        %v404 = vunpack.c.l.b16 %v365
        %v405 = vunpack.c.l.b16 %v366
        %v406 = vunpack.c.l.b16 %v367
        %v407 = vunpack.c.l.b16 %v368
        %v408 = vunpack.c.l.b16 %v369
        %v409 = vunpack.c.l.b16 %v370
        %v410 = vpack.c.b16 %v395, %v394
        %v411 = vpack.c.b16 %v397, %v396
        %v412 = vpack.c.b16 %v399, %v398
        %v413 = vpack.c.b16 %v401, %v400
        %v414 = vpack.c.b16 %v403, %v402
        %v415 = vpack.c.b16 %v405, %v404
        %v416 = vpack.c.b16 %v407, %v406
        %v417 = vpack.c.b16 %v409, %v408
        %426 = vmatprep.subr.bf16.mxu0 0
        %427 = vmatpush1.bf16.msra.mxu0 %v410
        %428 = vmatprep.subr.bf16.mxu0 0
        %429 = vmatpush1.bf16.msra.mxu0 %v411
        %430 = vmatprep.subr.bf16.mxu0 0
        %431 = vmatpush1.bf16.msra.mxu0 %v412
        %432 = vmatprep.subr.bf16.mxu0 0
        %433 = vmatpush1.bf16.msra.mxu0 %v413
        %434 = vmatprep.subr.bf16.mxu0 0
        %435 = vmatpush1.bf16.msra.mxu0 %v414
        %436 = vmatprep.subr.bf16.mxu0 0
        %437 = vmatpush1.bf16.msra.mxu0 %v415
        %438 = vmatprep.subr.bf16.mxu0 0
        %439 = vmatpush1.bf16.msra.mxu0 %v416
        %440 = vmatprep.subr.bf16.mxu0 0
        %441 = vmatpush1.bf16.msra.mxu0 %v417
        %442 = vmatprep.subr.bf16.mxu0 0
        %443 = vmatpush1.bf16.msra.mxu0 0
        %444 = vmatprep.subr.bf16.mxu0 0
        %445 = vmatpush1.bf16.msra.mxu0 0
        %446 = vmatprep.subr.bf16.mxu0 0
        %447 = vmatpush1.bf16.msra.mxu0 0
        %448 = vmatprep.subr.bf16.mxu0 0
        %449 = vmatpush1.bf16.msra.mxu0 0
        %450 = vmatprep.subr.bf16.mxu0 0
        %451 = vmatpush1.bf16.msra.mxu0 0
        %452 = vmatprep.subr.bf16.mxu0 0
        %453 = vmatpush1.bf16.msra.mxu0 0
        %454 = vmatprep.subr.bf16.mxu0 0
        %455 = vmatpush1.bf16.msra.mxu0 0
        %456 = vmatprep.subr.bf16.mxu0 0
        %457 = vmatpush1.bf16.msra.mxu0 0
        %458 = vmatprep.mubr.bf16.mxu0 0
        %459 = vmatmul.mubr.bf16.gmra.mrb[0].mxu0 %v354
        %v460 = vpop.f32.mrb[0].mxu0
        %v461 = vadd.f32 %v376, %v460
        %v462 = vpop.f32.mrb[0].mxu0
        %v463 = vpop.f32.mrb[0].mxu0
        %v464 = vadd.f32 %v376, %v463
        %v465 = vpop.f32.mrb[0].mxu0
        %466 = vdwg.mxu0
        %v467 = vtanh.pop %v461
        %v468 = vtanh.pop %v464
        %v469 = vpack.c.bf16 %v468, %v467
        %s470 = scalar_lea.vmem [#allocation8], 64
        %v471 = vld [vmem:[%s470] sm:$0xf]
        %v472 = vld [vmem:[%s470 + $0x4] sm:$0xf]
        %v473 = vld [vmem:[%s470 + $0x8] sm:$0xf]
        %v474 = vld [vmem:[%s470 + $0xc] sm:$0xf]
        %v475 = vld [vmem:[%s470 + $0x10] sm:$0xf]
        %v476 = vld [vmem:[%s470 + $0x14] sm:$0xf]
        %v477 = vld [vmem:[%s470 + $0x18] sm:$0xf]
        %v478 = vld [vmem:[%s470 + $0x1c] sm:$0xf]
        %v479 = vld [vmem:[%s470 + $0x20] sm:$0xf]
        %v480 = vld [vmem:[%s470 + $0x24] sm:$0xf]
        %v481 = vld [vmem:[%s470 + $0x28] sm:$0xf]
        %v482 = vld [vmem:[%s470 + $0x2c] sm:$0xf]
        %v483 = vld [vmem:[%s470 + $0x30] sm:$0xf]
        %v484 = vld [vmem:[%s470 + $0x34] sm:$0xf]
        %v485 = vld [vmem:[%s470 + $0x38] sm:$0xf]
        %v486 = vld [vmem:[%s470 + $0x3c] sm:$0xf]
        %s487 = scalar_lea.vmem %s4, 1
        %v488 = vld [vmem:[%s487] sm:$0x1]
        %v490 = vlaneseq
        %v491 = vshrl.u32 %v490, 7
        %v492 = vsub.s32 0, %v491
        %v493 = vrot.slane %v488, %v492
        %v511 = vunpack.c.l.b16 %v471
        %v512 = vunpack.c.l.b16 %v472
        %v513 = vunpack.c.l.b16 %v473
        %v514 = vunpack.c.l.b16 %v474
        %v515 = vunpack.c.l.b16 %v475
        %v516 = vunpack.c.l.b16 %v476
        %v517 = vunpack.c.l.b16 %v477
        %v518 = vunpack.c.l.b16 %v478
        %v519 = vunpack.c.l.b16 %v479
        %v520 = vunpack.c.l.b16 %v480
        %v521 = vunpack.c.l.b16 %v481
        %v522 = vunpack.c.l.b16 %v482
        %v523 = vunpack.c.l.b16 %v483
        %v524 = vunpack.c.l.b16 %v484
        %v525 = vunpack.c.l.b16 %v485
        %v526 = vunpack.c.l.b16 %v486
        %v527 = vpack.c.b16 %v512, %v511
        %v528 = vpack.c.b16 %v514, %v513
        %v529 = vpack.c.b16 %v516, %v515
        %v530 = vpack.c.b16 %v518, %v517
        %v531 = vpack.c.b16 %v520, %v519
        %v532 = vpack.c.b16 %v522, %v521
        %v533 = vpack.c.b16 %v524, %v523
        %v534 = vpack.c.b16 %v526, %v525
        %543 = vmatprep.subr.bf16.mxu0 0
        %544 = vmatpush1.bf16.msra.mxu0 %v527
        %545 = vmatprep.subr.bf16.mxu0 0
        %546 = vmatpush1.bf16.msra.mxu0 %v528
        %547 = vmatprep.subr.bf16.mxu0 0
        %548 = vmatpush1.bf16.msra.mxu0 %v529
        %549 = vmatprep.subr.bf16.mxu0 0
        %550 = vmatpush1.bf16.msra.mxu0 %v530
        %551 = vmatprep.subr.bf16.mxu0 0
        %552 = vmatpush1.bf16.msra.mxu0 %v531
        %553 = vmatprep.subr.bf16.mxu0 0
        %554 = vmatpush1.bf16.msra.mxu0 %v532
        %555 = vmatprep.subr.bf16.mxu0 0
        %556 = vmatpush1.bf16.msra.mxu0 %v533
        %557 = vmatprep.subr.bf16.mxu0 0
        %558 = vmatpush1.bf16.msra.mxu0 %v534
        %559 = vmatprep.subr.bf16.mxu0 0
        %560 = vmatpush1.bf16.msra.mxu0 0
        %561 = vmatprep.subr.bf16.mxu0 0
        %562 = vmatpush1.bf16.msra.mxu0 0
        %563 = vmatprep.subr.bf16.mxu0 0
        %564 = vmatpush1.bf16.msra.mxu0 0
        %565 = vmatprep.subr.bf16.mxu0 0
        %566 = vmatpush1.bf16.msra.mxu0 0
        %567 = vmatprep.subr.bf16.mxu0 0
        %568 = vmatpush1.bf16.msra.mxu0 0
        %569 = vmatprep.subr.bf16.mxu0 0
        %570 = vmatpush1.bf16.msra.mxu0 0
        %571 = vmatprep.subr.bf16.mxu0 0
        %572 = vmatpush1.bf16.msra.mxu0 0
        %573 = vmatprep.subr.bf16.mxu0 0
        %574 = vmatpush1.bf16.msra.mxu0 0
        %575 = vmatprep.mubr.bf16.mxu0 0
        %576 = vmatmul.mubr.bf16.gmra.mrb[0].mxu0 %v469
        %v577 = vpop.f32.mrb[0].mxu0
        %v578 = vadd.f32 %v493, %v577
        %v579 = vpop.f32.mrb[0].mxu0
        %v580 = vpop.f32.mrb[0].mxu0
        %v581 = vadd.f32 %v493, %v580
        %v582 = vpop.f32.mrb[0].mxu0
        %583 = vdwg.mxu0
        %v584 = vsel %vm344, 1, 0
        %vm585 = vcmp.eq.s32.totalorder %v584, 1
        %v586 = vsel %vm585, %v578, 0.0
        %v587 = vsel %vm585, %v581, 0.0
        %v588 = vsel %vm347, 1, 0
        %vm589 = vcmp.eq.s32.totalorder %v588, 1
        %v590 = vsel %vm589, %v578, 0.0
        %v591 = vsel %vm589, %v581, 0.0
        %v592 = vadd.f32 %v348, %v586
        %v593 = vadd.f32 %v349, %v587
        %v594 = vpack.c.bf16 %v593, %v592
        %s595 = scalar_lea.vmem [#allocation8], 128
        %v596 = vld [vmem:[%s595] sm:$0xf]
        %v597 = vld [vmem:[%s595 + $0x4] sm:$0xf]
        %v598 = vld [vmem:[%s595 + $0x8] sm:$0xf]
        %v599 = vld [vmem:[%s595 + $0xc] sm:$0xf]
        %v600 = vld [vmem:[%s595 + $0x10] sm:$0xf]
        %v601 = vld [vmem:[%s595 + $0x14] sm:$0xf]
        %v602 = vld [vmem:[%s595 + $0x18] sm:$0xf]
        %v603 = vld [vmem:[%s595 + $0x1c] sm:$0xf]
        %v604 = vld [vmem:[%s595 + $0x20] sm:$0xf]
        %v605 = vld [vmem:[%s595 + $0x24] sm:$0xf]
        %v606 = vld [vmem:[%s595 + $0x28] sm:$0xf]
        %v607 = vld [vmem:[%s595 + $0x2c] sm:$0xf]
        %v608 = vld [vmem:[%s595 + $0x30] sm:$0xf]
        %v609 = vld [vmem:[%s595 + $0x34] sm:$0xf]
        %v610 = vld [vmem:[%s595 + $0x38] sm:$0xf]
        %v611 = vld [vmem:[%s595 + $0x3c] sm:$0xf]
        %s612 = scalar_lea.vmem %s4, 2
        %v613 = vld [vmem:[%s612] sm:$0x1]
        %v615 = vlaneseq
        %v616 = vshrl.u32 %v615, 7
        %v617 = vsub.s32 0, %v616
        %v618 = vrot.slane %v613, %v617
        %v636 = vunpack.c.l.b16 %v596
        %v637 = vunpack.c.l.b16 %v597
        %v638 = vunpack.c.l.b16 %v598
        %v639 = vunpack.c.l.b16 %v599
        %v640 = vunpack.c.l.b16 %v600
        %v641 = vunpack.c.l.b16 %v601
        %v642 = vunpack.c.l.b16 %v602
        %v643 = vunpack.c.l.b16 %v603
        %v644 = vunpack.c.l.b16 %v604
        %v645 = vunpack.c.l.b16 %v605
        %v646 = vunpack.c.l.b16 %v606
        %v647 = vunpack.c.l.b16 %v607
        %v648 = vunpack.c.l.b16 %v608
        %v649 = vunpack.c.l.b16 %v609
        %v650 = vunpack.c.l.b16 %v610
        %v651 = vunpack.c.l.b16 %v611
        %v652 = vpack.c.b16 %v637, %v636
        %v653 = vpack.c.b16 %v639, %v638
        %v654 = vpack.c.b16 %v641, %v640
        %v655 = vpack.c.b16 %v643, %v642
        %v656 = vpack.c.b16 %v645, %v644
        %v657 = vpack.c.b16 %v647, %v646
        %v658 = vpack.c.b16 %v649, %v648
        %v659 = vpack.c.b16 %v651, %v650
        %668 = vmatprep.subr.bf16.mxu0 0
        %669 = vmatpush1.bf16.msra.mxu0 %v652
        %670 = vmatprep.subr.bf16.mxu0 0
        %671 = vmatpush1.bf16.msra.mxu0 %v653
        %672 = vmatprep.subr.bf16.mxu0 0
        %673 = vmatpush1.bf16.msra.mxu0 %v654
        %674 = vmatprep.subr.bf16.mxu0 0
        %675 = vmatpush1.bf16.msra.mxu0 %v655
        %676 = vmatprep.subr.bf16.mxu0 0
        %677 = vmatpush1.bf16.msra.mxu0 %v656
        %678 = vmatprep.subr.bf16.mxu0 0
        %679 = vmatpush1.bf16.msra.mxu0 %v657
        %680 = vmatprep.subr.bf16.mxu0 0
        %681 = vmatpush1.bf16.msra.mxu0 %v658
        %682 = vmatprep.subr.bf16.mxu0 0
        %683 = vmatpush1.bf16.msra.mxu0 %v659
        %684 = vmatprep.subr.bf16.mxu0 0
        %685 = vmatpush1.bf16.msra.mxu0 0
        %686 = vmatprep.subr.bf16.mxu0 0
        %687 = vmatpush1.bf16.msra.mxu0 0
        %688 = vmatprep.subr.bf16.mxu0 0
        %689 = vmatpush1.bf16.msra.mxu0 0
        %690 = vmatprep.subr.bf16.mxu0 0
        %691 = vmatpush1.bf16.msra.mxu0 0
        %692 = vmatprep.subr.bf16.mxu0 0
        %693 = vmatpush1.bf16.msra.mxu0 0
        %694 = vmatprep.subr.bf16.mxu0 0
        %695 = vmatpush1.bf16.msra.mxu0 0
        %696 = vmatprep.subr.bf16.mxu0 0
        %697 = vmatpush1.bf16.msra.mxu0 0
        %698 = vmatprep.subr.bf16.mxu0 0
        %699 = vmatpush1.bf16.msra.mxu0 0
        %700 = vmatprep.mubr.bf16.mxu0 0
        %701 = vmatmul.mubr.bf16.gmra.mrb[0].mxu0 %v594
        %v702 = vpop.f32.mrb[0].mxu0
        %v703 = vadd.f32 %v618, %v702
        %v704 = vpop.f32.mrb[0].mxu0
        %v705 = vpop.f32.mrb[0].mxu0
        %v706 = vadd.f32 %v618, %v705
        %v707 = vpop.f32.mrb[0].mxu0
        %708 = vdwg.mxu0
        %v709 = vtanh.pop %v703
        %v710 = vtanh.pop %v706
        %v711 = vpack.c.bf16 %v710, %v709
        %s712 = scalar_lea.vmem [#allocation8], 192
        %v713 = vld [vmem:[%s712] sm:$0xf]
        %v714 = vld [vmem:[%s712 + $0x4] sm:$0xf]
        %v715 = vld [vmem:[%s712 + $0x8] sm:$0xf]
        %v716 = vld [vmem:[%s712 + $0xc] sm:$0xf]
        %v717 = vld [vmem:[%s712 + $0x10] sm:$0xf]
        %v718 = vld [vmem:[%s712 + $0x14] sm:$0xf]
        %v719 = vld [vmem:[%s712 + $0x18] sm:$0xf]
        %v720 = vld [vmem:[%s712 + $0x1c] sm:$0xf]
        %v721 = vld [vmem:[%s712 + $0x20] sm:$0xf]
        %v722 = vld [vmem:[%s712 + $0x24] sm:$0xf]
        %v723 = vld [vmem:[%s712 + $0x28] sm:$0xf]
        %v724 = vld [vmem:[%s712 + $0x2c] sm:$0xf]
        %v725 = vld [vmem:[%s712 + $0x30] sm:$0xf]
        %v726 = vld [vmem:[%s712 + $0x34] sm:$0xf]
        %v727 = vld [vmem:[%s712 + $0x38] sm:$0xf]
        %v728 = vld [vmem:[%s712 + $0x3c] sm:$0xf]
        %s729 = scalar_lea.vmem %s4, 3
        %v730 = vld [vmem:[%s729] sm:$0x1]
        %v732 = vlaneseq
        %v733 = vshrl.u32 %v732, 7
        %v734 = vsub.s32 0, %v733
        %v735 = vrot.slane %v730, %v734
        %v753 = vunpack.c.l.b16 %v713
        %v754 = vunpack.c.l.b16 %v714
        %v755 = vunpack.c.l.b16 %v715
        %v756 = vunpack.c.l.b16 %v716
        %v757 = vunpack.c.l.b16 %v717
        %v758 = vunpack.c.l.b16 %v718
        %v759 = vunpack.c.l.b16 %v719
        %v760 = vunpack.c.l.b16 %v720
        %v761 = vunpack.c.l.b16 %v721
        %v762 = vunpack.c.l.b16 %v722
        %v763 = vunpack.c.l.b16 %v723
        %v764 = vunpack.c.l.b16 %v724
        %v765 = vunpack.c.l.b16 %v725
        %v766 = vunpack.c.l.b16 %v726
        %v767 = vunpack.c.l.b16 %v727
        %v768 = vunpack.c.l.b16 %v728
        %v769 = vpack.c.b16 %v754, %v753
        %v770 = vpack.c.b16 %v756, %v755
        %v771 = vpack.c.b16 %v758, %v757
        %v772 = vpack.c.b16 %v760, %v759
        %v773 = vpack.c.b16 %v762, %v761
        %v774 = vpack.c.b16 %v764, %v763
        %v775 = vpack.c.b16 %v766, %v765
        %v776 = vpack.c.b16 %v768, %v767
        %785 = vmatprep.subr.bf16.mxu0 0
        %786 = vmatpush1.bf16.msra.mxu0 %v769
        %787 = vmatprep.subr.bf16.mxu0 0
        %788 = vmatpush1.bf16.msra.mxu0 %v770
        %789 = vmatprep.subr.bf16.mxu0 0
        %790 = vmatpush1.bf16.msra.mxu0 %v771
        %791 = vmatprep.subr.bf16.mxu0 0
        %792 = vmatpush1.bf16.msra.mxu0 %v772
        %793 = vmatprep.subr.bf16.mxu0 0
        %794 = vmatpush1.bf16.msra.mxu0 %v773
        %795 = vmatprep.subr.bf16.mxu0 0
        %796 = vmatpush1.bf16.msra.mxu0 %v774
        %797 = vmatprep.subr.bf16.mxu0 0
        %798 = vmatpush1.bf16.msra.mxu0 %v775
        %799 = vmatprep.subr.bf16.mxu0 0
        %800 = vmatpush1.bf16.msra.mxu0 %v776
        %801 = vmatprep.subr.bf16.mxu0 0
        %802 = vmatpush1.bf16.msra.mxu0 0
        %803 = vmatprep.subr.bf16.mxu0 0
        %804 = vmatpush1.bf16.msra.mxu0 0
        %805 = vmatprep.subr.bf16.mxu0 0
        %806 = vmatpush1.bf16.msra.mxu0 0
        %807 = vmatprep.subr.bf16.mxu0 0
        %808 = vmatpush1.bf16.msra.mxu0 0
        %809 = vmatprep.subr.bf16.mxu0 0
        %810 = vmatpush1.bf16.msra.mxu0 0
        %811 = vmatprep.subr.bf16.mxu0 0
        %812 = vmatpush1.bf16.msra.mxu0 0
        %813 = vmatprep.subr.bf16.mxu0 0
        %814 = vmatpush1.bf16.msra.mxu0 0
        %815 = vmatprep.subr.bf16.mxu0 0
        %816 = vmatpush1.bf16.msra.mxu0 0
        %817 = vmatprep.mubr.bf16.mxu0 0
        %818 = vmatmul.mubr.bf16.gmra.mrb[0].mxu0 %v711
        %v819 = vpop.f32.mrb[0].mxu0
        %v820 = vadd.f32 %v735, %v819
        %v821 = vpop.f32.mrb[0].mxu0
        %v822 = vpop.f32.mrb[0].mxu0
        %v823 = vadd.f32 %v735, %v822
        %v824 = vpop.f32.mrb[0].mxu0
        %825 = vdwg.mxu0
        %v826 = vtanh.pop %v820
        %v827 = vtanh.pop %v823
        %v828 = vpack.c.bf16 %v827, %v826
        %s829 = scalar_lea.vmem [#allocation8], 256
        %v830 = vld [vmem:[%s829] sm:$0xf]
        %v831 = vld [vmem:[%s829 + $0x4] sm:$0xf]
        %v832 = vld [vmem:[%s829 + $0x8] sm:$0xf]
        %v833 = vld [vmem:[%s829 + $0xc] sm:$0xf]
        %v834 = vld [vmem:[%s829 + $0x10] sm:$0xf]
        %v835 = vld [vmem:[%s829 + $0x14] sm:$0xf]
        %v836 = vld [vmem:[%s829 + $0x18] sm:$0xf]
        %v837 = vld [vmem:[%s829 + $0x1c] sm:$0xf]
        %v838 = vld [vmem:[%s829 + $0x20] sm:$0xf]
        %v839 = vld [vmem:[%s829 + $0x24] sm:$0xf]
        %v840 = vld [vmem:[%s829 + $0x28] sm:$0xf]
        %v841 = vld [vmem:[%s829 + $0x2c] sm:$0xf]
        %v842 = vld [vmem:[%s829 + $0x30] sm:$0xf]
        %v843 = vld [vmem:[%s829 + $0x34] sm:$0xf]
        %v844 = vld [vmem:[%s829 + $0x38] sm:$0xf]
        %v845 = vld [vmem:[%s829 + $0x3c] sm:$0xf]
        %s846 = scalar_lea.vmem %s4, 4
        %v847 = vld [vmem:[%s846] sm:$0x1]
        %v849 = vlaneseq
        %v850 = vshrl.u32 %v849, 7
        %v851 = vsub.s32 0, %v850
        %v852 = vrot.slane %v847, %v851
        %v870 = vunpack.c.l.b16 %v830
        %v871 = vunpack.c.l.b16 %v831
        %v872 = vunpack.c.l.b16 %v832
        %v873 = vunpack.c.l.b16 %v833
        %v874 = vunpack.c.l.b16 %v834
        %v875 = vunpack.c.l.b16 %v835
        %v876 = vunpack.c.l.b16 %v836
        %v877 = vunpack.c.l.b16 %v837
        %v878 = vunpack.c.l.b16 %v838
        %v879 = vunpack.c.l.b16 %v839
        %v880 = vunpack.c.l.b16 %v840
        %v881 = vunpack.c.l.b16 %v841
        %v882 = vunpack.c.l.b16 %v842
        %v883 = vunpack.c.l.b16 %v843
        %v884 = vunpack.c.l.b16 %v844
        %v885 = vunpack.c.l.b16 %v845
        %v886 = vpack.c.b16 %v871, %v870
        %v887 = vpack.c.b16 %v873, %v872
        %v888 = vpack.c.b16 %v875, %v874
        %v889 = vpack.c.b16 %v877, %v876
        %v890 = vpack.c.b16 %v879, %v878
        %v891 = vpack.c.b16 %v881, %v880
        %v892 = vpack.c.b16 %v883, %v882
        %v893 = vpack.c.b16 %v885, %v884
        %902 = vmatprep.subr.bf16.mxu0 0
        %903 = vmatpush1.bf16.msra.mxu0 %v886
        %904 = vmatprep.subr.bf16.mxu0 0
        %905 = vmatpush1.bf16.msra.mxu0 %v887
        %906 = vmatprep.subr.bf16.mxu0 0
        %907 = vmatpush1.bf16.msra.mxu0 %v888
        %908 = vmatprep.subr.bf16.mxu0 0
        %909 = vmatpush1.bf16.msra.mxu0 %v889
        %910 = vmatprep.subr.bf16.mxu0 0
        %911 = vmatpush1.bf16.msra.mxu0 %v890
        %912 = vmatprep.subr.bf16.mxu0 0
        %913 = vmatpush1.bf16.msra.mxu0 %v891
        %914 = vmatprep.subr.bf16.mxu0 0
        %915 = vmatpush1.bf16.msra.mxu0 %v892
        %916 = vmatprep.subr.bf16.mxu0 0
        %917 = vmatpush1.bf16.msra.mxu0 %v893
        %918 = vmatprep.subr.bf16.mxu0 0
        %919 = vmatpush1.bf16.msra.mxu0 0
        %920 = vmatprep.subr.bf16.mxu0 0
        %921 = vmatpush1.bf16.msra.mxu0 0
        %922 = vmatprep.subr.bf16.mxu0 0
        %923 = vmatpush1.bf16.msra.mxu0 0
        %924 = vmatprep.subr.bf16.mxu0 0
        %925 = vmatpush1.bf16.msra.mxu0 0
        %926 = vmatprep.subr.bf16.mxu0 0
        %927 = vmatpush1.bf16.msra.mxu0 0
        %928 = vmatprep.subr.bf16.mxu0 0
        %929 = vmatpush1.bf16.msra.mxu0 0
        %930 = vmatprep.subr.bf16.mxu0 0
        %931 = vmatpush1.bf16.msra.mxu0 0
        %932 = vmatprep.subr.bf16.mxu0 0
        %933 = vmatpush1.bf16.msra.mxu0 0
        %934 = vmatprep.mubr.bf16.mxu0 0
        %935 = vmatmul.mubr.bf16.gmra.mrb[0].mxu0 %v828
        %v936 = vpop.f32.mrb[0].mxu0
        %v937 = vadd.f32 %v852, %v936
        %v938 = vpop.f32.mrb[0].mxu0
        %v939 = vpop.f32.mrb[0].mxu0
        %v940 = vadd.f32 %v852, %v939
        %v941 = vpop.f32.mrb[0].mxu0
        %942 = vdwg.mxu0
        %943 = vrot.lane.b32.xlu0 %v937, 64
        %v944 = vpop.permute.xlu0 %943
        %945 = vrot.lane.b32.xlu0 %v940, 64
        %v946 = vpop.permute.xlu0 %945
        %v947 = vmul.f32 %v944, 0.5
        %v948 = vmul.f32 %v946, 0.5
        %v949 = vmul.f32 %v947, 1.442695
        %v950 = vpow.pop %v949
        %v951 = vmul.f32 %v948, 1.442695
        %v952 = vpow.pop %v951
        %v953 = vmul.f32 %v352, %v950
        %v954 = vmul.f32 %v353, %v952
        %v955 = vadd.f32 %v937, %v953
        %v956 = vadd.f32 %v940, %v954
        %v957 = vadd.f32 %v955, %v590
        %v958 = vadd.f32 %v956, %v591
        %v959 = vpack.c.bf16 %v958, %v957
        %s960 = scalar_lea.vmem [#allocation8], 320
        %v961 = vld [vmem:[%s960] sm:$0xf]
        %v962 = vld [vmem:[%s960 + $0x4] sm:$0xf]
        %v963 = vld [vmem:[%s960 + $0x8] sm:$0xf]
        %v964 = vld [vmem:[%s960 + $0xc] sm:$0xf]
        %v965 = vld [vmem:[%s960 + $0x10] sm:$0xf]
        %v966 = vld [vmem:[%s960 + $0x14] sm:$0xf]
        %v967 = vld [vmem:[%s960 + $0x18] sm:$0xf]
        %v968 = vld [vmem:[%s960 + $0x1c] sm:$0xf]
        %v969 = vld [vmem:[%s960 + $0x20] sm:$0xf]
        %v970 = vld [vmem:[%s960 + $0x24] sm:$0xf]
        %v971 = vld [vmem:[%s960 + $0x28] sm:$0xf]
        %v972 = vld [vmem:[%s960 + $0x2c] sm:$0xf]
        %v973 = vld [vmem:[%s960 + $0x30] sm:$0xf]
        %v974 = vld [vmem:[%s960 + $0x34] sm:$0xf]
        %v975 = vld [vmem:[%s960 + $0x38] sm:$0xf]
        %v976 = vld [vmem:[%s960 + $0x3c] sm:$0xf]
        %s977 = scalar_lea.vmem %s4, 5
        %v978 = vld [vmem:[%s977] sm:$0x1]
        %v980 = vlaneseq
        %v981 = vshrl.u32 %v980, 7
        %v982 = vsub.s32 0, %v981
        %v983 = vrot.slane %v978, %v982
        %v1001 = vunpack.c.l.b16 %v961
        %v1002 = vunpack.c.l.b16 %v962
        %v1003 = vunpack.c.l.b16 %v963
        %v1004 = vunpack.c.l.b16 %v964
        %v1005 = vunpack.c.l.b16 %v965
        %v1006 = vunpack.c.l.b16 %v966
        %v1007 = vunpack.c.l.b16 %v967
        %v1008 = vunpack.c.l.b16 %v968
        %v1009 = vunpack.c.l.b16 %v969
        %v1010 = vunpack.c.l.b16 %v970
        %v1011 = vunpack.c.l.b16 %v971
        %v1012 = vunpack.c.l.b16 %v972
        %v1013 = vunpack.c.l.b16 %v973
        %v1014 = vunpack.c.l.b16 %v974
        %v1015 = vunpack.c.l.b16 %v975
        %v1016 = vunpack.c.l.b16 %v976
        %v1017 = vpack.c.b16 %v1002, %v1001
        %v1018 = vpack.c.b16 %v1004, %v1003
        %v1019 = vpack.c.b16 %v1006, %v1005
        %v1020 = vpack.c.b16 %v1008, %v1007
        %v1021 = vpack.c.b16 %v1010, %v1009
        %v1022 = vpack.c.b16 %v1012, %v1011
        %v1023 = vpack.c.b16 %v1014, %v1013
        %v1024 = vpack.c.b16 %v1016, %v1015
        %1033 = vmatprep.subr.bf16.mxu0 0
        %1034 = vmatpush1.bf16.msra.mxu0 %v1017
        %1035 = vmatprep.subr.bf16.mxu0 0
        %1036 = vmatpush1.bf16.msra.mxu0 %v1018
        %1037 = vmatprep.subr.bf16.mxu0 0
        %1038 = vmatpush1.bf16.msra.mxu0 %v1019
        %1039 = vmatprep.subr.bf16.mxu0 0
        %1040 = vmatpush1.bf16.msra.mxu0 %v1020
        %1041 = vmatprep.subr.bf16.mxu0 0
        %1042 = vmatpush1.bf16.msra.mxu0 %v1021
        %1043 = vmatprep.subr.bf16.mxu0 0
        %1044 = vmatpush1.bf16.msra.mxu0 %v1022
        %1045 = vmatprep.subr.bf16.mxu0 0
        %1046 = vmatpush1.bf16.msra.mxu0 %v1023
        %1047 = vmatprep.subr.bf16.mxu0 0
        %1048 = vmatpush1.bf16.msra.mxu0 %v1024
        %1049 = vmatprep.subr.bf16.mxu0 0
        %1050 = vmatpush1.bf16.msra.mxu0 0
        %1051 = vmatprep.subr.bf16.mxu0 0
        %1052 = vmatpush1.bf16.msra.mxu0 0
        %1053 = vmatprep.subr.bf16.mxu0 0
        %1054 = vmatpush1.bf16.msra.mxu0 0
        %1055 = vmatprep.subr.bf16.mxu0 0
        %1056 = vmatpush1.bf16.msra.mxu0 0
        %1057 = vmatprep.subr.bf16.mxu0 0
        %1058 = vmatpush1.bf16.msra.mxu0 0
        %1059 = vmatprep.subr.bf16.mxu0 0
        %1060 = vmatpush1.bf16.msra.mxu0 0
        %1061 = vmatprep.subr.bf16.mxu0 0
        %1062 = vmatpush1.bf16.msra.mxu0 0
        %1063 = vmatprep.subr.bf16.mxu0 0
        %1064 = vmatpush1.bf16.msra.mxu0 0
        %1065 = vmatprep.mubr.bf16.mxu0 0
        %1066 = vmatmul.mubr.bf16.gmra.mrb[0].mxu0 %v959
        %v1067 = vpop.f32.mrb[0].mxu0
        %v1068 = vadd.f32 %v983, %v1067
        %v1069 = vpop.f32.mrb[0].mxu0
        %v1070 = vpop.f32.mrb[0].mxu0
        %v1071 = vadd.f32 %v983, %v1070
        %v1072 = vpop.f32.mrb[0].mxu0
        %1073 = vdwg.mxu0
        %v1074 = vtanh.pop %v1068
        %v1075 = vtanh.pop %v1071
        %v1076 = vpack.c.bf16 %v1075, %v1074
        %s1077 = scalar_lea.vmem [#allocation8], 384
        %v1078 = vld [vmem:[%s1077] sm:$0xf]
        %v1079 = vld [vmem:[%s1077 + $0x4] sm:$0xf]
        %v1080 = vld [vmem:[%s1077 + $0x8] sm:$0xf]
        %v1081 = vld [vmem:[%s1077 + $0xc] sm:$0xf]
        %v1082 = vld [vmem:[%s1077 + $0x10] sm:$0xf]
        %v1083 = vld [vmem:[%s1077 + $0x14] sm:$0xf]
        %v1084 = vld [vmem:[%s1077 + $0x18] sm:$0xf]
        %v1085 = vld [vmem:[%s1077 + $0x1c] sm:$0xf]
        %v1086 = vld [vmem:[%s1077 + $0x20] sm:$0xf]
        %v1087 = vld [vmem:[%s1077 + $0x24] sm:$0xf]
        %v1088 = vld [vmem:[%s1077 + $0x28] sm:$0xf]
        %v1089 = vld [vmem:[%s1077 + $0x2c] sm:$0xf]
        %v1090 = vld [vmem:[%s1077 + $0x30] sm:$0xf]
        %v1091 = vld [vmem:[%s1077 + $0x34] sm:$0xf]
        %v1092 = vld [vmem:[%s1077 + $0x38] sm:$0xf]
        %v1093 = vld [vmem:[%s1077 + $0x3c] sm:$0xf]
        %s1094 = scalar_lea.vmem %s4, 6
        %v1095 = vld [vmem:[%s1094] sm:$0x1]
        %v1097 = vlaneseq
        %v1098 = vshrl.u32 %v1097, 7
        %v1099 = vsub.s32 0, %v1098
        %v1100 = vrot.slane %v1095, %v1099
        %v1118 = vunpack.c.l.b16 %v1078
        %v1119 = vunpack.c.l.b16 %v1079
        %v1120 = vunpack.c.l.b16 %v1080
        %v1121 = vunpack.c.l.b16 %v1081
        %v1122 = vunpack.c.l.b16 %v1082
        %v1123 = vunpack.c.l.b16 %v1083
        %v1124 = vunpack.c.l.b16 %v1084
        %v1125 = vunpack.c.l.b16 %v1085
        %v1126 = vunpack.c.l.b16 %v1086
        %v1127 = vunpack.c.l.b16 %v1087
        %v1128 = vunpack.c.l.b16 %v1088
        %v1129 = vunpack.c.l.b16 %v1089
        %v1130 = vunpack.c.l.b16 %v1090
        %v1131 = vunpack.c.l.b16 %v1091
        %v1132 = vunpack.c.l.b16 %v1092
        %v1133 = vunpack.c.l.b16 %v1093
        %v1134 = vpack.c.b16 %v1119, %v1118
        %v1135 = vpack.c.b16 %v1121, %v1120
        %v1136 = vpack.c.b16 %v1123, %v1122
        %v1137 = vpack.c.b16 %v1125, %v1124
        %v1138 = vpack.c.b16 %v1127, %v1126
        %v1139 = vpack.c.b16 %v1129, %v1128
        %v1140 = vpack.c.b16 %v1131, %v1130
        %v1141 = vpack.c.b16 %v1133, %v1132
        %1150 = vmatprep.subr.bf16.mxu0 0
        %1151 = vmatpush1.bf16.msra.mxu0 %v1134
        %1152 = vmatprep.subr.bf16.mxu0 0
        %1153 = vmatpush1.bf16.msra.mxu0 %v1135
        %1154 = vmatprep.subr.bf16.mxu0 0
        %1155 = vmatpush1.bf16.msra.mxu0 %v1136
        %1156 = vmatprep.subr.bf16.mxu0 0
        %1157 = vmatpush1.bf16.msra.mxu0 %v1137
        %1158 = vmatprep.subr.bf16.mxu0 0
        %1159 = vmatpush1.bf16.msra.mxu0 %v1138
        %1160 = vmatprep.subr.bf16.mxu0 0
        %1161 = vmatpush1.bf16.msra.mxu0 %v1139
        %1162 = vmatprep.subr.bf16.mxu0 0
        %1163 = vmatpush1.bf16.msra.mxu0 %v1140
        %1164 = vmatprep.subr.bf16.mxu0 0
        %1165 = vmatpush1.bf16.msra.mxu0 %v1141
        %1166 = vmatprep.subr.bf16.mxu0 0
        %1167 = vmatpush1.bf16.msra.mxu0 0
        %1168 = vmatprep.subr.bf16.mxu0 0
        %1169 = vmatpush1.bf16.msra.mxu0 0
        %1170 = vmatprep.subr.bf16.mxu0 0
        %1171 = vmatpush1.bf16.msra.mxu0 0
        %1172 = vmatprep.subr.bf16.mxu0 0
        %1173 = vmatpush1.bf16.msra.mxu0 0
        %1174 = vmatprep.subr.bf16.mxu0 0
        %1175 = vmatpush1.bf16.msra.mxu0 0
        %1176 = vmatprep.subr.bf16.mxu0 0
        %1177 = vmatpush1.bf16.msra.mxu0 0
        %1178 = vmatprep.subr.bf16.mxu0 0
        %1179 = vmatpush1.bf16.msra.mxu0 0
        %1180 = vmatprep.subr.bf16.mxu0 0
        %1181 = vmatpush1.bf16.msra.mxu0 0
        %1182 = vmatprep.mubr.bf16.mxu0 0
        %1183 = vmatmul.mubr.bf16.gmra.mrb[0].mxu0 %v1076
        %v1184 = vpop.f32.mrb[0].mxu0
        %v1185 = vadd.f32 %v1100, %v1184
        %v1186 = vpop.f32.mrb[0].mxu0
        %v1187 = vpop.f32.mrb[0].mxu0
        %v1188 = vadd.f32 %v1100, %v1187
        %v1189 = vpop.f32.mrb[0].mxu0
        %1190 = vdwg.mxu0
        %v1191 = vtanh.pop %v1185
        %v1192 = vtanh.pop %v1188
        %v1193 = vpack.c.bf16 %v1192, %v1191
        %s1194 = scalar_lea.vmem [#allocation8], 448
        %v1195 = vld [vmem:[%s1194] sm:$0xf]
        %v1196 = vld [vmem:[%s1194 + $0x4] sm:$0xf]
        %v1197 = vld [vmem:[%s1194 + $0x8] sm:$0xf]
        %v1198 = vld [vmem:[%s1194 + $0xc] sm:$0xf]
        %v1199 = vld [vmem:[%s1194 + $0x10] sm:$0xf]
        %v1200 = vld [vmem:[%s1194 + $0x14] sm:$0xf]
        %v1201 = vld [vmem:[%s1194 + $0x18] sm:$0xf]
        %v1202 = vld [vmem:[%s1194 + $0x1c] sm:$0xf]
        %v1203 = vld [vmem:[%s1194 + $0x20] sm:$0xf]
        %v1204 = vld [vmem:[%s1194 + $0x24] sm:$0xf]
        %v1205 = vld [vmem:[%s1194 + $0x28] sm:$0xf]
        %v1206 = vld [vmem:[%s1194 + $0x2c] sm:$0xf]
        %v1207 = vld [vmem:[%s1194 + $0x30] sm:$0xf]
        %v1208 = vld [vmem:[%s1194 + $0x34] sm:$0xf]
        %v1209 = vld [vmem:[%s1194 + $0x38] sm:$0xf]
        %v1210 = vld [vmem:[%s1194 + $0x3c] sm:$0xf]
        %s1211 = scalar_lea.vmem %s4, 7
        %v1212 = vld [vmem:[%s1211] sm:$0x1]
        %v1214 = vlaneseq
        %v1215 = vshrl.u32 %v1214, 7
        %v1216 = vsub.s32 0, %v1215
        %v1217 = vrot.slane %v1212, %v1216
        %v1235 = vunpack.c.l.b16 %v1195
        %v1236 = vunpack.c.l.b16 %v1196
        %v1237 = vunpack.c.l.b16 %v1197
        %v1238 = vunpack.c.l.b16 %v1198
        %v1239 = vunpack.c.l.b16 %v1199
        %v1240 = vunpack.c.l.b16 %v1200
        %v1241 = vunpack.c.l.b16 %v1201
        %v1242 = vunpack.c.l.b16 %v1202
        %v1243 = vunpack.c.l.b16 %v1203
        %v1244 = vunpack.c.l.b16 %v1204
        %v1245 = vunpack.c.l.b16 %v1205
        %v1246 = vunpack.c.l.b16 %v1206
        %v1247 = vunpack.c.l.b16 %v1207
        %v1248 = vunpack.c.l.b16 %v1208
        %v1249 = vunpack.c.l.b16 %v1209
        %v1250 = vunpack.c.l.b16 %v1210
        %v1251 = vpack.c.b16 %v1236, %v1235
        %v1252 = vpack.c.b16 %v1238, %v1237
        %v1253 = vpack.c.b16 %v1240, %v1239
        %v1254 = vpack.c.b16 %v1242, %v1241
        %v1255 = vpack.c.b16 %v1244, %v1243
        %v1256 = vpack.c.b16 %v1246, %v1245
        %v1257 = vpack.c.b16 %v1248, %v1247
        %v1258 = vpack.c.b16 %v1250, %v1249
        %1267 = vmatprep.subr.bf16.mxu0 0
        %1268 = vmatpush1.bf16.msra.mxu0 %v1251
        %1269 = vmatprep.subr.bf16.mxu0 0
        %1270 = vmatpush1.bf16.msra.mxu0 %v1252
        %1271 = vmatprep.subr.bf16.mxu0 0
        %1272 = vmatpush1.bf16.msra.mxu0 %v1253
        %1273 = vmatprep.subr.bf16.mxu0 0
        %1274 = vmatpush1.bf16.msra.mxu0 %v1254
        %1275 = vmatprep.subr.bf16.mxu0 0
        %1276 = vmatpush1.bf16.msra.mxu0 %v1255
        %1277 = vmatprep.subr.bf16.mxu0 0
        %1278 = vmatpush1.bf16.msra.mxu0 %v1256
        %1279 = vmatprep.subr.bf16.mxu0 0
        %1280 = vmatpush1.bf16.msra.mxu0 %v1257
        %1281 = vmatprep.subr.bf16.mxu0 0
        %1282 = vmatpush1.bf16.msra.mxu0 %v1258
        %1283 = vmatprep.subr.bf16.mxu0 0
        %1284 = vmatpush1.bf16.msra.mxu0 0
        %1285 = vmatprep.subr.bf16.mxu0 0
        %1286 = vmatpush1.bf16.msra.mxu0 0
        %1287 = vmatprep.subr.bf16.mxu0 0
        %1288 = vmatpush1.bf16.msra.mxu0 0
        %1289 = vmatprep.subr.bf16.mxu0 0
        %1290 = vmatpush1.bf16.msra.mxu0 0
        %1291 = vmatprep.subr.bf16.mxu0 0
        %1292 = vmatpush1.bf16.msra.mxu0 0
        %1293 = vmatprep.subr.bf16.mxu0 0
        %1294 = vmatpush1.bf16.msra.mxu0 0
        %1295 = vmatprep.subr.bf16.mxu0 0
        %1296 = vmatpush1.bf16.msra.mxu0 0
        %1297 = vmatprep.subr.bf16.mxu0 0
        %1298 = vmatpush1.bf16.msra.mxu0 0
        %1299 = vmatprep.mubr.bf16.mxu0 0
        %1300 = vmatmul.mubr.bf16.gmra.mrb[0].mxu0 %v1193
        %v1301 = vpop.f32.mrb[0].mxu0
        %v1302 = vadd.f32 %v1217, %v1301
        %v1303 = vpop.f32.mrb[0].mxu0
        %v1304 = vpop.f32.mrb[0].mxu0
        %v1305 = vadd.f32 %v1217, %v1304
        %v1306 = vpop.f32.mrb[0].mxu0
        %1307 = vdwg.mxu0
        %v1308 = vld [vmem:[%s276 + $0x10] sm:$0xff]
        %v1309 = vld [vmem:[%s276 + $0x18] sm:$0xff]
        %v1310 = vld [vmem:[%s285 + $0x10] sm:$0xff]
        %v1311 = vld [vmem:[%s285 + $0x18] sm:$0xff]
        %v1312 = vld [vmem:[%s294 + $0x10] sm:$0xff]
        %v1313 = vld [vmem:[%s294 + $0x18] sm:$0xff]
        %v1314 = vpack.c.bf16 %v1311, %v1310
        %1315 = vmatprep.subr.bf16.mxu0 0
        %1316 = vmatpush1.bf16.msra.mxu0 %v410
        %1317 = vmatprep.subr.bf16.mxu0 0
        %1318 = vmatpush1.bf16.msra.mxu0 %v411
        %1319 = vmatprep.subr.bf16.mxu0 0
        %1320 = vmatpush1.bf16.msra.mxu0 %v412
        %1321 = vmatprep.subr.bf16.mxu0 0
        %1322 = vmatpush1.bf16.msra.mxu0 %v413
        %1323 = vmatprep.subr.bf16.mxu0 0
        %1324 = vmatpush1.bf16.msra.mxu0 %v414
        %1325 = vmatprep.subr.bf16.mxu0 0
        %1326 = vmatpush1.bf16.msra.mxu0 %v415
        %1327 = vmatprep.subr.bf16.mxu0 0
        %1328 = vmatpush1.bf16.msra.mxu0 %v416
        %1329 = vmatprep.subr.bf16.mxu0 0
        %1330 = vmatpush1.bf16.msra.mxu0 %v417
        %1331 = vmatprep.subr.bf16.mxu0 0
        %1332 = vmatpush1.bf16.msra.mxu0 0
        %1333 = vmatprep.subr.bf16.mxu0 0
        %1334 = vmatpush1.bf16.msra.mxu0 0
        %1335 = vmatprep.subr.bf16.mxu0 0
        %1336 = vmatpush1.bf16.msra.mxu0 0
        %1337 = vmatprep.subr.bf16.mxu0 0
        %1338 = vmatpush1.bf16.msra.mxu0 0
        %1339 = vmatprep.subr.bf16.mxu0 0
        %1340 = vmatpush1.bf16.msra.mxu0 0
        %1341 = vmatprep.subr.bf16.mxu0 0
        %1342 = vmatpush1.bf16.msra.mxu0 0
        %1343 = vmatprep.subr.bf16.mxu0 0
        %1344 = vmatpush1.bf16.msra.mxu0 0
        %1345 = vmatprep.subr.bf16.mxu0 0
        %1346 = vmatpush1.bf16.msra.mxu0 0
        %1347 = vmatprep.mubr.bf16.mxu0 0
        %1348 = vmatmul.mubr.bf16.gmra.mrb[0].mxu0 %v1314
        %v1349 = vpop.f32.mrb[0].mxu0
        %v1350 = vadd.f32 %v376, %v1349
        %v1351 = vpop.f32.mrb[0].mxu0
        %v1352 = vpop.f32.mrb[0].mxu0
        %v1353 = vadd.f32 %v376, %v1352
        %v1354 = vpop.f32.mrb[0].mxu0
        %1355 = vdwg.mxu0
        %v1356 = vtanh.pop %v1350
        %v1357 = vtanh.pop %v1353
        %v1358 = vpack.c.bf16 %v1357, %v1356
        %1359 = vmatprep.subr.bf16.mxu0 0
        %1360 = vmatpush1.bf16.msra.mxu0 %v527
        %1361 = vmatprep.subr.bf16.mxu0 0
        %1362 = vmatpush1.bf16.msra.mxu0 %v528
        %1363 = vmatprep.subr.bf16.mxu0 0
        %1364 = vmatpush1.bf16.msra.mxu0 %v529
        %1365 = vmatprep.subr.bf16.mxu0 0
        %1366 = vmatpush1.bf16.msra.mxu0 %v530
        %1367 = vmatprep.subr.bf16.mxu0 0
        %1368 = vmatpush1.bf16.msra.mxu0 %v531
        %1369 = vmatprep.subr.bf16.mxu0 0
        %1370 = vmatpush1.bf16.msra.mxu0 %v532
        %1371 = vmatprep.subr.bf16.mxu0 0
        %1372 = vmatpush1.bf16.msra.mxu0 %v533
        %1373 = vmatprep.subr.bf16.mxu0 0
        %1374 = vmatpush1.bf16.msra.mxu0 %v534
        %1375 = vmatprep.subr.bf16.mxu0 0
        %1376 = vmatpush1.bf16.msra.mxu0 0
        %1377 = vmatprep.subr.bf16.mxu0 0
        %1378 = vmatpush1.bf16.msra.mxu0 0
        %1379 = vmatprep.subr.bf16.mxu0 0
        %1380 = vmatpush1.bf16.msra.mxu0 0
        %1381 = vmatprep.subr.bf16.mxu0 0
        %1382 = vmatpush1.bf16.msra.mxu0 0
        %1383 = vmatprep.subr.bf16.mxu0 0
        %1384 = vmatpush1.bf16.msra.mxu0 0
        %1385 = vmatprep.subr.bf16.mxu0 0
        %1386 = vmatpush1.bf16.msra.mxu0 0
        %1387 = vmatprep.subr.bf16.mxu0 0
        %1388 = vmatpush1.bf16.msra.mxu0 0
        %1389 = vmatprep.subr.bf16.mxu0 0
        %1390 = vmatpush1.bf16.msra.mxu0 0
        %1391 = vmatprep.mubr.bf16.mxu0 0
        %1392 = vmatmul.mubr.bf16.gmra.mrb[0].mxu0 %v1358
        %v1393 = vpop.f32.mrb[0].mxu0
        %v1394 = vadd.f32 %v493, %v1393
        %v1395 = vpop.f32.mrb[0].mxu0
        %v1396 = vpop.f32.mrb[0].mxu0
        %v1397 = vadd.f32 %v493, %v1396
        %v1398 = vpop.f32.mrb[0].mxu0
        %1399 = vdwg.mxu0
        %v1400 = vsel %vm585, %v1394, 0.0
        %v1401 = vsel %vm585, %v1397, 0.0
        %v1402 = vsel %vm589, %v1394, 0.0
        %v1403 = vsel %vm589, %v1397, 0.0
        %v1404 = vadd.f32 %v1308, %v1400
        %v1405 = vadd.f32 %v1309, %v1401
        %v1406 = vpack.c.bf16 %v1405, %v1404
        %1407 = vmatprep.subr.bf16.mxu0 0
        %1408 = vmatpush1.bf16.msra.mxu0 %v652
        %1409 = vmatprep.subr.bf16.mxu0 0
        %1410 = vmatpush1.bf16.msra.mxu0 %v653
        %1411 = vmatprep.subr.bf16.mxu0 0
        %1412 = vmatpush1.bf16.msra.mxu0 %v654
        %1413 = vmatprep.subr.bf16.mxu0 0
        %1414 = vmatpush1.bf16.msra.mxu0 %v655
        %1415 = vmatprep.subr.bf16.mxu0 0
        %1416 = vmatpush1.bf16.msra.mxu0 %v656
        %1417 = vmatprep.subr.bf16.mxu0 0
        %1418 = vmatpush1.bf16.msra.mxu0 %v657
        %1419 = vmatprep.subr.bf16.mxu0 0
        %1420 = vmatpush1.bf16.msra.mxu0 %v658
        %1421 = vmatprep.subr.bf16.mxu0 0
        %1422 = vmatpush1.bf16.msra.mxu0 %v659
        %1423 = vmatprep.subr.bf16.mxu0 0
        %1424 = vmatpush1.bf16.msra.mxu0 0
        %1425 = vmatprep.subr.bf16.mxu0 0
        %1426 = vmatpush1.bf16.msra.mxu0 0
        %1427 = vmatprep.subr.bf16.mxu0 0
        %1428 = vmatpush1.bf16.msra.mxu0 0
        %1429 = vmatprep.subr.bf16.mxu0 0
        %1430 = vmatpush1.bf16.msra.mxu0 0
        %1431 = vmatprep.subr.bf16.mxu0 0
        %1432 = vmatpush1.bf16.msra.mxu0 0
        %1433 = vmatprep.subr.bf16.mxu0 0
        %1434 = vmatpush1.bf16.msra.mxu0 0
        %1435 = vmatprep.subr.bf16.mxu0 0
        %1436 = vmatpush1.bf16.msra.mxu0 0
        %1437 = vmatprep.subr.bf16.mxu0 0
        %1438 = vmatpush1.bf16.msra.mxu0 0
        %1439 = vmatprep.mubr.bf16.mxu0 0
        %1440 = vmatmul.mubr.bf16.gmra.mrb[0].mxu0 %v1406
        %v1441 = vpop.f32.mrb[0].mxu0
        %v1442 = vadd.f32 %v618, %v1441
        %v1443 = vpop.f32.mrb[0].mxu0
        %v1444 = vpop.f32.mrb[0].mxu0
        %v1445 = vadd.f32 %v618, %v1444
        %v1446 = vpop.f32.mrb[0].mxu0
        %1447 = vdwg.mxu0
        %v1448 = vtanh.pop %v1442
        %v1449 = vtanh.pop %v1445
        %v1450 = vpack.c.bf16 %v1449, %v1448
        %1451 = vmatprep.subr.bf16.mxu0 0
        %1452 = vmatpush1.bf16.msra.mxu0 %v769
        %1453 = vmatprep.subr.bf16.mxu0 0
        %1454 = vmatpush1.bf16.msra.mxu0 %v770
        %1455 = vmatprep.subr.bf16.mxu0 0
        %1456 = vmatpush1.bf16.msra.mxu0 %v771
        %1457 = vmatprep.subr.bf16.mxu0 0
        %1458 = vmatpush1.bf16.msra.mxu0 %v772
        %1459 = vmatprep.subr.bf16.mxu0 0
        %1460 = vmatpush1.bf16.msra.mxu0 %v773
        %1461 = vmatprep.subr.bf16.mxu0 0
        %1462 = vmatpush1.bf16.msra.mxu0 %v774
        %1463 = vmatprep.subr.bf16.mxu0 0
        %1464 = vmatpush1.bf16.msra.mxu0 %v775
        %1465 = vmatprep.subr.bf16.mxu0 0
        %1466 = vmatpush1.bf16.msra.mxu0 %v776
        %1467 = vmatprep.subr.bf16.mxu0 0
        %1468 = vmatpush1.bf16.msra.mxu0 0
        %1469 = vmatprep.subr.bf16.mxu0 0
        %1470 = vmatpush1.bf16.msra.mxu0 0
        %1471 = vmatprep.subr.bf16.mxu0 0
        %1472 = vmatpush1.bf16.msra.mxu0 0
        %1473 = vmatprep.subr.bf16.mxu0 0
        %1474 = vmatpush1.bf16.msra.mxu0 0
        %1475 = vmatprep.subr.bf16.mxu0 0
        %1476 = vmatpush1.bf16.msra.mxu0 0
        %1477 = vmatprep.subr.bf16.mxu0 0
        %1478 = vmatpush1.bf16.msra.mxu0 0
        %1479 = vmatprep.subr.bf16.mxu0 0
        %1480 = vmatpush1.bf16.msra.mxu0 0
        %1481 = vmatprep.subr.bf16.mxu0 0
        %1482 = vmatpush1.bf16.msra.mxu0 0
        %1483 = vmatprep.mubr.bf16.mxu0 0
        %1484 = vmatmul.mubr.bf16.gmra.mrb[0].mxu0 %v1450
        %v1485 = vpop.f32.mrb[0].mxu0
        %v1486 = vadd.f32 %v735, %v1485
        %v1487 = vpop.f32.mrb[0].mxu0
        %v1488 = vpop.f32.mrb[0].mxu0
        %v1489 = vadd.f32 %v735, %v1488
        %v1490 = vpop.f32.mrb[0].mxu0
        %1491 = vdwg.mxu0
        %v1492 = vtanh.pop %v1486
        %v1493 = vtanh.pop %v1489
        %v1494 = vpack.c.bf16 %v1493, %v1492
        %1495 = vmatprep.subr.bf16.mxu0 0
        %1496 = vmatpush1.bf16.msra.mxu0 %v886
        %1497 = vmatprep.subr.bf16.mxu0 0
        %1498 = vmatpush1.bf16.msra.mxu0 %v887
        %1499 = vmatprep.subr.bf16.mxu0 0
        %1500 = vmatpush1.bf16.msra.mxu0 %v888
        %1501 = vmatprep.subr.bf16.mxu0 0
        %1502 = vmatpush1.bf16.msra.mxu0 %v889
        %1503 = vmatprep.subr.bf16.mxu0 0
        %1504 = vmatpush1.bf16.msra.mxu0 %v890
        %1505 = vmatprep.subr.bf16.mxu0 0
        %1506 = vmatpush1.bf16.msra.mxu0 %v891
        %1507 = vmatprep.subr.bf16.mxu0 0
        %1508 = vmatpush1.bf16.msra.mxu0 %v892
        %1509 = vmatprep.subr.bf16.mxu0 0
        %1510 = vmatpush1.bf16.msra.mxu0 %v893
        %1511 = vmatprep.subr.bf16.mxu0 0
        %1512 = vmatpush1.bf16.msra.mxu0 0
        %1513 = vmatprep.subr.bf16.mxu0 0
        %1514 = vmatpush1.bf16.msra.mxu0 0
        %1515 = vmatprep.subr.bf16.mxu0 0
        %1516 = vmatpush1.bf16.msra.mxu0 0
        %1517 = vmatprep.subr.bf16.mxu0 0
        %1518 = vmatpush1.bf16.msra.mxu0 0
        %1519 = vmatprep.subr.bf16.mxu0 0
        %1520 = vmatpush1.bf16.msra.mxu0 0
        %1521 = vmatprep.subr.bf16.mxu0 0
        %1522 = vmatpush1.bf16.msra.mxu0 0
        %1523 = vmatprep.subr.bf16.mxu0 0
        %1524 = vmatpush1.bf16.msra.mxu0 0
        %1525 = vmatprep.subr.bf16.mxu0 0
        %1526 = vmatpush1.bf16.msra.mxu0 0
        %1527 = vmatprep.mubr.bf16.mxu0 0
        %1528 = vmatmul.mubr.bf16.gmra.mrb[0].mxu0 %v1494
        %v1529 = vpop.f32.mrb[0].mxu0
        %v1530 = vadd.f32 %v852, %v1529
        %v1531 = vpop.f32.mrb[0].mxu0
        %v1532 = vpop.f32.mrb[0].mxu0
        %v1533 = vadd.f32 %v852, %v1532
        %v1534 = vpop.f32.mrb[0].mxu0
        %1535 = vdwg.mxu0
        %1536 = vrot.lane.b32.xlu0 %v1530, 64
        %v1537 = vpop.permute.xlu0 %1536
        %1538 = vrot.lane.b32.xlu0 %v1533, 64
        %v1539 = vpop.permute.xlu0 %1538
        %v1540 = vmul.f32 %v1537, 0.5
        %v1541 = vmul.f32 %v1539, 0.5
        %v1542 = vmul.f32 %v1540, 1.442695
        %v1543 = vpow.pop %v1542
        %v1544 = vmul.f32 %v1541, 1.442695
        %v1545 = vpow.pop %v1544
        %v1546 = vmul.f32 %v1312, %v1543
        %v1547 = vmul.f32 %v1313, %v1545
        %v1548 = vadd.f32 %v1530, %v1546
        %v1549 = vadd.f32 %v1533, %v1547
        %v1550 = vadd.f32 %v1548, %v1402
        %v1551 = vadd.f32 %v1549, %v1403
        %v1552 = vpack.c.bf16 %v1551, %v1550
        %1553 = vmatprep.subr.bf16.mxu0 0
        %1554 = vmatpush1.bf16.msra.mxu0 %v1017
        %1555 = vmatprep.subr.bf16.mxu0 0
        %1556 = vmatpush1.bf16.msra.mxu0 %v1018
        %1557 = vmatprep.subr.bf16.mxu0 0
        %1558 = vmatpush1.bf16.msra.mxu0 %v1019
        %1559 = vmatprep.subr.bf16.mxu0 0
        %1560 = vmatpush1.bf16.msra.mxu0 %v1020
        %1561 = vmatprep.subr.bf16.mxu0 0
        %1562 = vmatpush1.bf16.msra.mxu0 %v1021
        %1563 = vmatprep.subr.bf16.mxu0 0
        %1564 = vmatpush1.bf16.msra.mxu0 %v1022
        %1565 = vmatprep.subr.bf16.mxu0 0
        %1566 = vmatpush1.bf16.msra.mxu0 %v1023
        %1567 = vmatprep.subr.bf16.mxu0 0
        %1568 = vmatpush1.bf16.msra.mxu0 %v1024
        %1569 = vmatprep.subr.bf16.mxu0 0
        %1570 = vmatpush1.bf16.msra.mxu0 0
        %1571 = vmatprep.subr.bf16.mxu0 0
        %1572 = vmatpush1.bf16.msra.mxu0 0
        %1573 = vmatprep.subr.bf16.mxu0 0
        %1574 = vmatpush1.bf16.msra.mxu0 0
        %1575 = vmatprep.subr.bf16.mxu0 0
        %1576 = vmatpush1.bf16.msra.mxu0 0
        %1577 = vmatprep.subr.bf16.mxu0 0
        %1578 = vmatpush1.bf16.msra.mxu0 0
        %1579 = vmatprep.subr.bf16.mxu0 0
        %1580 = vmatpush1.bf16.msra.mxu0 0
        %1581 = vmatprep.subr.bf16.mxu0 0
        %1582 = vmatpush1.bf16.msra.mxu0 0
        %1583 = vmatprep.subr.bf16.mxu0 0
        %1584 = vmatpush1.bf16.msra.mxu0 0
        %1585 = vmatprep.mubr.bf16.mxu0 0
        %1586 = vmatmul.mubr.bf16.gmra.mrb[0].mxu0 %v1552
        %v1587 = vpop.f32.mrb[0].mxu0
        %v1588 = vadd.f32 %v983, %v1587
        %v1589 = vpop.f32.mrb[0].mxu0
        %v1590 = vpop.f32.mrb[0].mxu0
        %v1591 = vadd.f32 %v983, %v1590
        %v1592 = vpop.f32.mrb[0].mxu0
        %1593 = vdwg.mxu0
        %v1594 = vtanh.pop %v1588
        %v1595 = vtanh.pop %v1591
        %v1596 = vpack.c.bf16 %v1595, %v1594
        %1597 = vmatprep.subr.bf16.mxu0 0
        %1598 = vmatpush1.bf16.msra.mxu0 %v1134
        %1599 = vmatprep.subr.bf16.mxu0 0
        %1600 = vmatpush1.bf16.msra.mxu0 %v1135
        %1601 = vmatprep.subr.bf16.mxu0 0
        %1602 = vmatpush1.bf16.msra.mxu0 %v1136
        %1603 = vmatprep.subr.bf16.mxu0 0
        %1604 = vmatpush1.bf16.msra.mxu0 %v1137
        %1605 = vmatprep.subr.bf16.mxu0 0
        %1606 = vmatpush1.bf16.msra.mxu0 %v1138
        %1607 = vmatprep.subr.bf16.mxu0 0
        %1608 = vmatpush1.bf16.msra.mxu0 %v1139
        %1609 = vmatprep.subr.bf16.mxu0 0
        %1610 = vmatpush1.bf16.msra.mxu0 %v1140
        %1611 = vmatprep.subr.bf16.mxu0 0
        %1612 = vmatpush1.bf16.msra.mxu0 %v1141
        %1613 = vmatprep.subr.bf16.mxu0 0
        %1614 = vmatpush1.bf16.msra.mxu0 0
        %1615 = vmatprep.subr.bf16.mxu0 0
        %1616 = vmatpush1.bf16.msra.mxu0 0
        %1617 = vmatprep.subr.bf16.mxu0 0
        %1618 = vmatpush1.bf16.msra.mxu0 0
        %1619 = vmatprep.subr.bf16.mxu0 0
        %1620 = vmatpush1.bf16.msra.mxu0 0
        %1621 = vmatprep.subr.bf16.mxu0 0
        %1622 = vmatpush1.bf16.msra.mxu0 0
        %1623 = vmatprep.subr.bf16.mxu0 0
        %1624 = vmatpush1.bf16.msra.mxu0 0
        %1625 = vmatprep.subr.bf16.mxu0 0
        %1626 = vmatpush1.bf16.msra.mxu0 0
        %1627 = vmatprep.subr.bf16.mxu0 0
        %1628 = vmatpush1.bf16.msra.mxu0 0
        %1629 = vmatprep.mubr.bf16.mxu0 0
        %1630 = vmatmul.mubr.bf16.gmra.mrb[0].mxu0 %v1596
        %v1631 = vpop.f32.mrb[0].mxu0
        %v1632 = vadd.f32 %v1100, %v1631
        %v1633 = vpop.f32.mrb[0].mxu0
        %v1634 = vpop.f32.mrb[0].mxu0
        %v1635 = vadd.f32 %v1100, %v1634
        %v1636 = vpop.f32.mrb[0].mxu0
        %1637 = vdwg.mxu0
        %v1638 = vtanh.pop %v1632
        %v1639 = vtanh.pop %v1635
        %v1640 = vpack.c.bf16 %v1639, %v1638
        %1641 = vmatprep.subr.bf16.mxu0 0
        %1642 = vmatpush1.bf16.msra.mxu0 %v1251
        %1643 = vmatprep.subr.bf16.mxu0 0
        %1644 = vmatpush1.bf16.msra.mxu0 %v1252
        %1645 = vmatprep.subr.bf16.mxu0 0
        %1646 = vmatpush1.bf16.msra.mxu0 %v1253
        %1647 = vmatprep.subr.bf16.mxu0 0
        %1648 = vmatpush1.bf16.msra.mxu0 %v1254
        %1649 = vmatprep.subr.bf16.mxu0 0
        %1650 = vmatpush1.bf16.msra.mxu0 %v1255
        %1651 = vmatprep.subr.bf16.mxu0 0
        %1652 = vmatpush1.bf16.msra.mxu0 %v1256
        %1653 = vmatprep.subr.bf16.mxu0 0
        %1654 = vmatpush1.bf16.msra.mxu0 %v1257
        %1655 = vmatprep.subr.bf16.mxu0 0
        %1656 = vmatpush1.bf16.msra.mxu0 %v1258
        %1657 = vmatprep.subr.bf16.mxu0 0
        %1658 = vmatpush1.bf16.msra.mxu0 0
        %1659 = vmatprep.subr.bf16.mxu0 0
        %1660 = vmatpush1.bf16.msra.mxu0 0
        %1661 = vmatprep.subr.bf16.mxu0 0
        %1662 = vmatpush1.bf16.msra.mxu0 0
        %1663 = vmatprep.subr.bf16.mxu0 0
        %1664 = vmatpush1.bf16.msra.mxu0 0
        %1665 = vmatprep.subr.bf16.mxu0 0
        %1666 = vmatpush1.bf16.msra.mxu0 0
        %1667 = vmatprep.subr.bf16.mxu0 0
        %1668 = vmatpush1.bf16.msra.mxu0 0
        %1669 = vmatprep.subr.bf16.mxu0 0
        %1670 = vmatpush1.bf16.msra.mxu0 0
        %1671 = vmatprep.subr.bf16.mxu0 0
        %1672 = vmatpush1.bf16.msra.mxu0 0
        %1673 = vmatprep.mubr.bf16.mxu0 0
        %1674 = vmatmul.mubr.bf16.gmra.mrb[0].mxu0 %v1640
        %v1675 = vpop.f32.mrb[0].mxu0
        %v1676 = vadd.f32 %v1217, %v1675
        %v1677 = vpop.f32.mrb[0].mxu0
        %v1678 = vpop.f32.mrb[0].mxu0
        %v1679 = vadd.f32 %v1217, %v1678
        %v1680 = vpop.f32.mrb[0].mxu0
        %1681 = vdwg.mxu0
        %1682 = vst [vmem:[%s334] sm:$0xff] %v1302
        %1683 = vst [vmem:[%s334 + $0x18] sm:$0xff] %v1305
        %1684 = vst [vmem:[%s334 + $0x8] sm:$0xff] %v937
        %1685 = vst [vmem:[%s334 + $0x20] sm:$0xff] %v940
        %1686 = vst [vmem:[%s334 + $0x10] sm:$0xff] %v944
        %1687 = vst [vmem:[%s334 + $0x28] sm:$0xff] %v946
        %1688 = vst [vmem:[%s334 + $0x30] sm:$0xff] %v1676
        %1689 = vst [vmem:[%s334 + $0x48] sm:$0xff] %v1679
        %1690 = vst [vmem:[%s334 + $0x38] sm:$0xff] %v1530
        %1691 = vst [vmem:[%s334 + $0x50] sm:$0xff] %v1533
        %1692 = vst [vmem:[%s334 + $0x40] sm:$0xff] %v1537
        %1693 = vst [vmem:[%s334 + $0x58] sm:$0xff] %v1539
        %s1694 = sand.u32 %s154, 1
        %s1695 = scalar_lea.sflag [#allocation4], %s1694
        %s1696 = sand.u32 %s154, 1
        %s1697 = smul.addr %s1696, 96
        %s1698 = scalar_lea.vmem [#allocation10], %s1697
        // Predicated region
        $region57: #{tpu_custom_call.1} parent=39 // pred_check
          %p1699 = pneg %p164
        $region58: #{tpu_custom_call.1} parent=39 // pred_check_branch
          %1701 = sbr.rel (%p1699) target = $region60
        $region59: #{tpu_custom_call.1} parent=39 // pred_region
          %s1702 = smul.u32 4, %s26
          %s1704 = ssub.s32 1536, 1536
          %1705 = vsyncadd %s1695, %s1704
          %s1706 = smul.addr %s1702, 3
          %s1707 = smul.addr %s1706, 128
          %s1708 = scalar_lea.hbm %s5, %s1707
          %s1709 = sshll.u32 %s1698, 4
          %s1710 = int_to_ptr.vmem [resolvable:$true] %s1709
          %1715 = dma.vmem_to_hbm [thread:$0]  %s1710, 1536, %s1708, %s1695, 384, 384, 24
        $region60: #{tpu_custom_call.1} parent=39 // pred_fallthru
          _
      $region40: #{tpu_custom_call.1} parent=5 // pred_fallthru
        _
      %p1716 = scmp.le.s32.totalorder 2, %s21
      // Predicated region
      $region61: #{tpu_custom_call.1} parent=5 // pred_check
        %p1717 = pneg %p1716
      $region62: #{tpu_custom_call.1} parent=5 // pred_check_branch
        %1719 = sbr.rel (%p1717) target = $region64
      $region63: #{tpu_custom_call.1} parent=5 // pred_region
        %s1720 = ssub.s32 %s21, 2
        // Predicated region
        $region65: #{tpu_custom_call.1} parent=63 // pred_check
          %p1721 = pneg %p170
        $region66: #{tpu_custom_call.1} parent=63 // pred_check_branch
          %1723 = sbr.rel (%p1721) target = $region68
        $region67: #{tpu_custom_call.1} parent=63 // pred_region
          %s1724 = sand.u32 %s155, 1
          %s1725 = scalar_lea.sflag [#allocation4], %s1724
          %s1726 = sand.u32 %s155, 1
          %s1727 = smul.addr %s1726, 96
          %s1728 = scalar_lea.vmem [#allocation10], %s1727
          %1729 = dma.done %s1725, 1536
        $region68: #{tpu_custom_call.1} parent=63 // pred_fallthru
          _
      $region64: #{tpu_custom_call.1} parent=5 // pred_fallthru
        _
    $region6: #{tpu_custom_call.1} parent=1 // loop_footer
      %s25 = sadd.s32 1, %s21
    $region7: #{tpu_custom_call.1} parent=1 // loop_footer_branch
      %20 = sbr.rel target = $region3
    $region8: #{tpu_custom_call.1} parent=1 // loop_exit
      _
    %1730 = vsyncpa [#allocation3], 1
    %s1731 = scalar_lea.sflag [#allocation3], 1
    %1732 = vsyncpa %s1731, 1
    %1733 = vsyncpa [#allocation6], 1
    %s1734 = scalar_lea.sflag [#allocation6], 1
    %1735 = vsyncpa %s1734, 1
    %1736 = vsyncpa [#allocation9], 1
    %1737 = vsyncpa [#allocation4], 1
    %s1738 = scalar_lea.sflag [#allocation4], 1
    %1739 = vsyncpa %s1738, 1

</llo_original>
